<compile_context>
chip_gen: v6e
topology: v6e:2x2x1
jax: 0.10.0
libtpu: 0.0.40
codegen_flags: <defaults>
</compile_context>

<pallas_src>
import jax
import jax.numpy as jnp
from jax.experimental import pallas as pl
from jax.experimental.pallas import tpu as pltpu

EPS = 1e-5
TILE_M_TARGET = 512            # rows of the im2col matrix per grid step


def _round_up(x, m):
    return (x + m - 1) // m * m


def _tpu_vmem_bytes():
    try:
        return int(getattr(pltpu.get_tpu_info(), "vmem_capacity_bytes", 128 << 20))
    except Exception:
        return 128 << 20


_VMEM_CAP = _tpu_vmem_bytes()
# v7x has 64 MiB VMEM per TensorCore (use 48 MiB scoped); v5e/v6e have 128 MiB.
VMEM_LIMIT = (48 << 20) if _VMEM_CAP <= (64 << 20) else (64 << 20)
FUSE_VMEM_BUDGET = int(0.6 * VMEM_LIMIT)


# ------------- fused path: conv (matmul) + BN stats + BN apply in VMEM -------
def make_fused_conv_bn_kernel(tile_m, m_true, relu, add_residual, eps):
    """Output block is resident across the whole 'arbitrary' M grid; per-tile
    matmul results are stashed into it (bf16) while f32 sum/sum^2 accumulate in
    scratch; at the last step BN scale/shift [+ residual] [+ ReLU] is applied
    in-place, so y never round-trips through HBM."""
    inv_m = 1.0 / float(m_true)
    align = tile_m & (-tile_m)     # largest power-of-2 factor of tile_m (>=16)

    def kernel(*refs):
        if add_residual:
            p_ref, w_ref, gamma_ref, beta_ref, r_ref, o_ref, sum_ref, sq_ref = refs
        else:
            p_ref, w_ref, gamma_ref, beta_ref, o_ref, sum_ref, sq_ref = refs
            r_ref = None
        i = pl.program_id(0)

        y = jnp.dot(p_ref[...], w_ref[...], preferred_element_type=jnp.float32)

        @pl.when(i == 0)
        def _init():
            sum_ref[...] = jnp.zeros_like(sum_ref)
            sq_ref[...] = jnp.zeros_like(sq_ref)

        sum_ref[...] += jnp.sum(y, axis=0, keepdims=True)
        sq_ref[...] += jnp.sum(y * y, axis=0, keepdims=True)

        row = pl.multiple_of(i * tile_m, align)
        o_ref[pl.ds(row, tile_m), :] = y.astype(o_ref.dtype)

        @pl.when(i == pl.num_programs(0) - 1)
        def _finalize():
            mean = sum_ref[...] * inv_m            # padded rows contribute 0
            var = jnp.maximum(sq_ref[...] * inv_m - mean * mean, 0.0)
            inv = jax.lax.rsqrt(var + eps)
            scale = gamma_ref[...] * inv
            shift = beta_ref[...] - mean * scale
            out = o_ref[...].astype(jnp.float32) * scale + shift
            if add_residual:
                out = out + r_ref[...].astype(jnp.float32)
            if relu:
                out = jnp.maximum(out, 0.0)
            o_ref[...] = out.astype(o_ref.dtype)

    return kernel


def conv_bn_fused(patches_bf16, w_bf16, gamma_p, beta_p, residual,
                  *, m_true, tile_m, relu, eps):
    m_pad, k_pad = patches_bf16.shape
    c_pad = w_bf16.shape[1]
    grid_m = m_pad // tile_m
    add_res = residual is not None

    inputs = [patches_bf16, w_bf16, gamma_p, beta_p] + ([residual] if add_res else [])
    in_specs = [
        pl.BlockSpec((tile_m, k_pad), lambda i: (i, 0)),   # streamed patch tiles
        pl.BlockSpec((k_pad, c_pad), lambda i: (0, 0)),    # full weight, resident
        pl.BlockSpec((1, c_pad), lambda i: (0, 0)),        # gamma
        pl.BlockSpec((1, c_pad), lambda i: (0, 0)),        # beta
    ]
    if add_res:
        in_specs.append(pl.BlockSpec((m_pad, c_pad), lambda i: (0, 0)))  # resident

    flops = 2 * m_pad * k_pad * c_pad
    bytes_accessed = (patches_bf16.size * 2 + w_bf16.size * 2
                      + m_pad * c_pad * 2
                      + (m_pad * c_pad * 2 if add_res else 0) + 4 * c_pad * 4)

    return pl.pallas_call(
        make_fused_conv_bn_kernel(tile_m, m_true, relu, add_res, eps),
        grid=(grid_m,),
        in_specs=in_specs,
        out_specs=pl.BlockSpec((m_pad, c_pad), lambda i: (0, 0)),  # VMEM-resident
        out_shape=jax.ShapeDtypeStruct((m_pad, c_pad), jnp.bfloat16),
        scratch_shapes=[pltpu.VMEM((1, c_pad), jnp.float32),
                        pltpu.VMEM((1, c_pad), jnp.float32)],
        compiler_params=pltpu.CompilerParams(
            dimension_semantics=("arbitrary",),   # BN reduction over M tiles
            vmem_limit_bytes=VMEM_LIMIT),
        cost_estimate=pl.CostEstimate(flops=int(flops), transcendentals=int(c_pad),
                                      bytes_accessed=int(bytes_accessed)),
    )(*inputs)


# ------------- fallback kernel 1: conv (matmul) + BN stats (big layers) ------
def conv_stats_kernel(p_ref, w_ref, y_ref, sum_ref, sq_ref):
    """y = patches @ w (bf16 on MXU, f32 accumulate); one-pass sum / sum^2.
    Grid = (m_split, m_tiles); stats accumulate along the trailing axis only."""
    y = jnp.dot(p_ref[...], w_ref[...], preferred_element_type=jnp.float32)
    y_ref[...] = y.astype(y_ref.dtype)                 # bf16 intermediate
    s = jnp.sum(y, axis=0, keepdims=True)
    ss = jnp.sum(y * y, axis=0, keepdims=True)

    @pl.when(pl.program_id(1) == 0)
    def _init():
        sum_ref[...] = s
        sq_ref[...] = ss

    @pl.when(pl.program_id(1) > 0)
    def _acc():
        sum_ref[...] += s
        sq_ref[...] += ss


def conv_stats(patches_bf16, w_bf16, *, tile_m):
    m_pad, k_pad = patches_bf16.shape
    c_pad = w_bf16.shape[1]
    grid_m = m_pad // tile_m
    # Split M across a leading "parallel" axis so the dominant kernel can use
    # both v7x TensorCores (harmless on single-TC v5e/v6e).
    num_splits = 2 if (grid_m >= 2 and grid_m % 2 == 0) else 1
    grid_per = grid_m // num_splits

    flops = 2 * m_pad * k_pad * c_pad
    bytes_accessed = (patches_bf16.size * 2 + w_bf16.size * 2
                      + m_pad * c_pad * 2 + 2 * num_splits * c_pad * 4)
    return pl.pallas_call(
        conv_stats_kernel,
        grid=(num_splits, grid_per),
        in_specs=[
            pl.BlockSpec((tile_m, k_pad), lambda c, i: (c * grid_per + i, 0)),
            pl.BlockSpec((k_pad, c_pad), lambda c, i: (0, 0)),
        ],
        out_specs=(
            pl.BlockSpec((tile_m, c_pad), lambda c, i: (c * grid_per + i, 0)),
            pl.BlockSpec((1, c_pad), lambda c, i: (c, 0)),   # per-split sum acc
            pl.BlockSpec((1, c_pad), lambda c, i: (c, 0)),   # per-split sum^2 acc
        ),
        out_shape=(
            jax.ShapeDtypeStruct((m_pad, c_pad), jnp.bfloat16),
            jax.ShapeDtypeStruct((num_splits, c_pad), jnp.float32),
            jax.ShapeDtypeStruct((num_splits, c_pad), jnp.float32),
        ),
        compiler_params=pltpu.CompilerParams(
            dimension_semantics=("parallel", "arbitrary"),
            vmem_limit_bytes=VMEM_LIMIT),
        cost_estimate=pl.CostEstimate(flops=int(flops), transcendentals=0,
                                      bytes_accessed=int(bytes_accessed)),
    )(patches_bf16, w_bf16)


# --------- fallback kernel 2: folded BN scale/shift (+res, +ReLU) ------------
def make_bn_apply_kernel(relu: bool, add_residual: bool):
    def kernel(*refs):
        if add_residual:
            y_ref, scale_ref, shift_ref, r_ref, o_ref = refs
        else:
            y_ref, scale_ref, shift_ref, o_ref = refs
            r_ref = None
        out = y_ref[...].astype(jnp.float32) * scale_ref[...] + shift_ref[...]
        if add_residual:
            out = out + r_ref[...].astype(jnp.float32)
        if relu:
            out = jnp.maximum(out, 0.0)
        o_ref[...] = out.astype(o_ref.dtype)
    return kernel


def bn_apply(y, scale, shift, residual, *, relu, tile_m):
    m_pad, c_pad = y.shape
    grid_m = m_pad // tile_m
    add_res = residual is not None
    inputs = [y, scale, shift] + ([residual] if add_res else [])
    in_specs = [
        pl.BlockSpec((tile_m, c_pad), lambda i: (i, 0)),
        pl.BlockSpec((1, c_pad), lambda i: (0, 0)),
        pl.BlockSpec((1, c_pad), lambda i: (0, 0)),
    ]
    if add_res:
        in_specs.append(pl.BlockSpec((tile_m, c_pad), lambda i: (i, 0)))
    bytes_accessed = sum(int(a.size) * a.dtype.itemsize for a in inputs) \
        + m_pad * c_pad * 2
    return pl.pallas_call(
        make_bn_apply_kernel(relu, add_res),
        grid=(grid_m,),
        in_specs=in_specs,
        out_specs=pl.BlockSpec((tile_m, c_pad), lambda i: (i, 0)),
        out_shape=jax.ShapeDtypeStruct((m_pad, c_pad), jnp.bfloat16),
        compiler_params=pltpu.CompilerParams(
            dimension_semantics=("parallel",),   # independent M tiles (megacore)
            vmem_limit_bytes=VMEM_LIMIT),
        cost_estimate=pl.CostEstimate(flops=int(4 * m_pad * c_pad),
                                      transcendentals=0,
                                      bytes_accessed=int(bytes_accessed)),
    )(*inputs)


# --------------------------------- JAX glue ----------------------------------
def im2col(x, kh, kw, stride, pad):
    """x: (N,H,W,C) -> bf16 patches (N*OH*OW, KH*KW*C) and output dims.
    Cast to bf16 FIRST so the KH*KW-way materialization is half-width."""
    N, H, W, C = x.shape
    x = x.astype(jnp.bfloat16)
    if pad > 0:
        x = jnp.pad(x, ((0, 0), (pad, pad), (pad, pad), (0, 0)))
    OH = (H + 2 * pad - kh) // stride + 1
    OW = (W + 2 * pad - kw) // stride + 1
    if kh == 1 and kw == 1:
        patches = x[:, ::stride, ::stride, :] if stride != 1 else x
    else:
        cols = []
        for i in range(kh):
            for j in range(kw):
                cols.append(x[:, i:i + stride * (OH - 1) + 1:stride,
                              j:j + stride * (OW - 1) + 1:stride, :])
        patches = jnp.concatenate(cols, axis=-1)   # (N,OH,OW,KH*KW*C)
    return patches.reshape(N * OH * OW, kh * kw * C), (N, OH, OW)


def conv_bn(params, x, stride, relu, residual=None, eps=EPS):
    """One Conv_BN_ReLU layer (optionally fused residual add + merge ReLU)."""
    w, gamma, beta = params                   # w: (KH,KW,Cin,Cout) HWIO
    kh, kw, cin, cout = w.shape
    pad = kh // 2
    patches, (N, OH, OW) = im2col(x, kh, kw, stride, pad)
    M, K = patches.shape

    # Lane-dense channel padding (256-multiples above 128 to fill the 256-wide
    # v6e/v7x MXU); K padded to 128 lanes; tile rows a multiple of 16 (bf16
    # sublane packing).
    c_pad = _round_up(cout, 128) if cout <= 128 else _round_up(cout, 256)
    k_pad = _round_up(K, 128)
    tile_m = min(_round_up(M, 16), TILE_M_TARGET)
    m_pad = _round_up(M, tile_m)

    patches_p = patches
    if m_pad != M or k_pad != K:
        patches_p = jnp.pad(patches, ((0, m_pad - M), (0, k_pad - K)))
    w_p = jnp.pad(w.reshape(kh * kw * cin, cout),
                  ((0, k_pad - K), (0, c_pad - cout))).astype(jnp.bfloat16)
    gamma_p = jnp.pad(gamma, (0, c_pad - cout)).reshape(1, c_pad)
    beta_p = jnp.pad(beta, (0, c_pad - cout)).reshape(1, c_pad)

    res_p = None
    if residual is not None:
        res_p = residual.reshape(M, cout)
        if res_p.dtype != jnp.bfloat16:
            res_p = res_p.astype(jnp.bfloat16)
        if m_pad != M or c_pad != cout:            # skip no-op pads
            res_p = jnp.pad(res_p, ((0, m_pad - M), (0, c_pad - cout)))

    # Fused path if the resident output (+ residual) fits the VMEM budget.
    fused_bytes = (2 * tile_m * k_pad * 2          # double-buffered patch tiles
                   + k_pad * c_pad * 2             # weights
                   + 2 * m_pad * c_pad * 2         # resident output
                   + (m_pad * c_pad * 2 if res_p is not None else 0)
                   + 8 * c_pad * 4)
    if fused_bytes <= FUSE_VMEM_BUDGET:
        out = conv_bn_fused(patches_p, w_p, gamma_p, beta_p, res_p,
                            m_true=M, tile_m=tile_m, relu=relu, eps=eps)
    else:
        y, psum, psq = conv_stats(patches_p, w_p, tile_m=tile_m)
        ch_sum = jnp.sum(psum, axis=0, keepdims=True)
        ch_sq = jnp.sum(psq, axis=0, keepdims=True)
        inv_m = 1.0 / M                  # true M; padded rows contribute 0
        mean = ch_sum * inv_m
        var = jnp.maximum(ch_sq * inv_m - mean * mean, 0.0)
        inv = jax.lax.rsqrt(var + eps)
        scale = gamma_p * inv
        shift = beta_p - mean * scale
        out = bn_apply(y, scale, shift, res_p, relu=relu, tile_m=tile_m)

    if m_pad != M or c_pad != cout:                # skip no-op slice
        out = out[:M, :cout]
    return out.reshape(N, OH, OW, cout)


# ------------------------------ building blocks ------------------------------
def normal_block(params, x):
    h = conv_bn(params["conv_in"], x, params["stride"], relu=True)
    sc = (conv_bn(params["shortcut"], x, params["stride"], relu=False)
          if params["shortcut"] is not None else x)
    # conv_out (no relu) + shortcut add + merge ReLU fused into its epilogue.
    return conv_bn(params["conv_out"], h, 1, relu=True, residual=sc)


def bottleneck_block(params, x):
    h = conv_bn(params["conv_in"], x, 1, relu=True)
    h = conv_bn(params["conv_mid"], h, params["stride"], relu=True)
    sc = (conv_bn(params["shortcut"], x, params["stride"], relu=False)
          if params["shortcut"] is not None else x)
    return conv_bn(params["conv_out"], h, 1, relu=True, residual=sc)


# ------------------------------ parameter init -------------------------------
def kaiming_conv(key, kh, kw, cin, cout):
    fan_in = cin * kh * kw
    std = (2.0 / fan_in) ** 0.5  # kaiming_normal_, fan_in, relu gain
    return jax.random.normal(key, (kh, kw, cin, cout), jnp.float32) * std


def make_conv_bn_params(key, k, cin, cout):
    return (kaiming_conv(key, k, k, cin, cout),
            jnp.ones((cout,), jnp.float32),      # BN gamma
            jnp.zeros((cout,), jnp.float32))     # BN beta


def make_normal_block(key, out_channels, stride, in_channels):
    k1, k2, k3 = jax.random.split(key, 3)
    return {
        "type": "normal",
        "stride": stride,
        "conv_in": make_conv_bn_params(k1, 3, in_channels, out_channels),
        "conv_out": make_conv_bn_params(k2, 3, out_channels, out_channels),
        "shortcut": (make_conv_bn_params(k3, 1, in_channels, out_channels)
                     if (in_channels != out_channels or stride != 1) else None),
    }


def make_bottleneck_block(key, mid_channels, stride, in_channels):
    out_channels = mid_channels * 4
    k1, k2, k3, k4 = jax.random.split(key, 4)
    return {
        "type": "bottleneck",
        "stride": stride,
        "conv_in": make_conv_bn_params(k1, 1, in_channels, mid_channels),
        "conv_mid": make_conv_bn_params(k2, 3, mid_channels, mid_channels),
        "conv_out": make_conv_bn_params(k3, 1, mid_channels, out_channels),
        "shortcut": (make_conv_bn_params(k4, 1, in_channels, out_channels)
                     if (in_channels != out_channels or stride != 1) else None),
    }


def make_bblock_group(key, building_block_name, block_group_size,
                      in_channels, channel_level, stride):
    keys = jax.random.split(key, block_group_size)
    if building_block_name == "normal":
        maker, auto_in = make_normal_block, channel_level
    elif building_block_name == "bottleneck":
        maker, auto_in = make_bottleneck_block, channel_level * 4
    else:
        raise ValueError("invalid building block name")
    blocks = [maker(keys[0], channel_level, stride, in_channels)]
    for i in range(1, block_group_size):
        blocks.append(maker(keys[i], channel_level, 1, auto_in))
    return blocks


def bblock_group_forward(blocks, x_nchw):
    # NCHW -> NHWC; activations flow through the group in bf16 (MXU inputs and
    # layer outputs are bf16 anyway); final output cast back to f32 NCHW.
    x = jnp.transpose(x_nchw, (0, 2, 3, 1)).astype(jnp.bfloat16)
    for b in blocks:
        x = normal_block(b, x) if b["type"] == "normal" else bottleneck_block(b, x)
    return jnp.transpose(x, (0, 3, 1, 2)).astype(jnp.float32)


# ----------------------------------- main ------------------------------------
if __name__ == "__main__":
    key = jax.random.PRNGKey(0)
    kx, kp_n, kp_b = jax.random.split(key, 3)

    x = jax.random.normal(kx, (2, 4, 16, 16), jnp.float32)  # NCHW like PyTorch

    # BBlockGroup('normal', block_group_size=2, in_channels=4, channel_level=8, stride=2)
    normal_group = make_bblock_group(kp_n, "normal", 2, 4, 8, 2)
    y_n = jax.jit(lambda t: bblock_group_forward(normal_group, t))(x)
    jax.block_until_ready(y_n)
    assert y_n.shape == (2, 8, 8, 8), y_n.shape

    # BBlockGroup('bottleneck', block_group_size=2, in_channels=4, channel_level=4, stride=2)
    bottleneck_group = make_bblock_group(kp_b, "bottleneck", 2, 4, 4, 2)
    y_b = jax.jit(lambda t: bblock_group_forward(bottleneck_group, t))(x)
    jax.block_until_ready(y_b)
    assert y_b.shape == (2, 16, 8, 8), y_b.shape

    print("KERNEL_OK")
</pallas_src>

<mosaic_0001>
module attributes {stable_mosaic.version = 11 : i64} {
  func.func @kernel(%arg0: i32, %arg1: memref<128x128xbf16, #tpu.memory_space<vmem>>, %arg2: memref<128x128xbf16, #tpu.memory_space<vmem>>, %arg3: memref<1x128xf32, #tpu.memory_space<vmem>>, %arg4: memref<1x128xf32, #tpu.memory_space<vmem>>, %arg5: memref<128x128xbf16, #tpu.memory_space<vmem>>, %arg6: memref<1x128xf32, #tpu.memory_space<vmem>>, %arg7: memref<1x128xf32, #tpu.memory_space<vmem>>) attributes {dimension_semantics = [#tpu.dimension_semantics<arbitrary>], iteration_bounds = array<i64: 1>, scalar_prefetch = 0 : i64, scratch_operands = 2 : i64, tpu.core_type = #tpu.core_type<tc>, window_params = [{transform_indices = @transform_0, window_bounds = array<i64: 128, 128>}, {pipeline_mode = #tpu.pipeline_mode<synchronous>, transform_indices = @transform_1, window_bounds = array<i64: 128, 128>}, {pipeline_mode = #tpu.pipeline_mode<synchronous>, transform_indices = @transform_2, window_bounds = array<i64: 1, 128>}, {pipeline_mode = #tpu.pipeline_mode<synchronous>, transform_indices = @transform_3, window_bounds = array<i64: 1, 128>}, {pipeline_mode = #tpu.pipeline_mode<synchronous>, transform_indices = @transform_4, window_bounds = array<i64: 128, 128>}]} {
    %c0 = arith.constant 0 : index
    %c0_0 = arith.constant 0 : index
    %0 = vector.load %arg1[%c0, %c0_0] : memref<128x128xbf16, #tpu.memory_space<vmem>>, vector<128x128xbf16>
    %c0_1 = arith.constant 0 : index
    %c0_2 = arith.constant 0 : index
    %1 = vector.load %arg2[%c0_1, %c0_2] : memref<128x128xbf16, #tpu.memory_space<vmem>>, vector<128x128xbf16>
    %cst = arith.constant dense<0.000000e+00> : vector<128x128xf32>
    %2 = tpu.matmul %0, %1, %cst {dimension_numbers = #tpu.dot_dimension_numbers<[1], [0], [0], [1], [0, 0, 1, 1], [], []>} : vector<128x128xbf16>, vector<128x128xbf16>, vector<128x128xf32> -> vector<128x128xf32>
    %c0_i32 = arith.constant 0 : i32
    %3 = arith.cmpi eq, %arg0, %c0_i32 : i32
    %4 = arith.extui %3 : i1 to i32
    %c0_i32_3 = arith.constant 0 : i32
    %5 = arith.cmpi ne, %4, %c0_i32_3 : i32
    scf.if %5 {
      %cst_17 = arith.constant 0.000000e+00 : f32
      %25 = vector.broadcast %cst_17 : f32 to vector<1x128xf32>
      %c0_18 = arith.constant 0 : index
      %c0_19 = arith.constant 0 : index
      %26 = vector.load %arg6[%c0_18, %c0_19] : memref<1x128xf32, #tpu.memory_space<vmem>>, vector<1x128xf32>
      tpu.vector_store %arg6[%c0_18, %c0_19], %25 {strides = array<i32>} : memref<1x128xf32, #tpu.memory_space<vmem>>, vector<1x128xf32>,
      %cst_20 = arith.constant 0.000000e+00 : f32
      %27 = vector.broadcast %cst_20 : f32 to vector<1x128xf32>
      %c0_21 = arith.constant 0 : index
      %c0_22 = arith.constant 0 : index
      %28 = vector.load %arg7[%c0_21, %c0_22] : memref<1x128xf32, #tpu.memory_space<vmem>>, vector<1x128xf32>
      tpu.vector_store %arg7[%c0_21, %c0_22], %27 {strides = array<i32>} : memref<1x128xf32, #tpu.memory_space<vmem>>, vector<1x128xf32>,
    } else {
    }
    %c0_4 = arith.constant 0 : index
    %c0_5 = arith.constant 0 : index
    %6 = vector.load %arg6[%c0_4, %c0_5] : memref<1x128xf32, #tpu.memory_space<vmem>>, vector<1x128xf32>
    %cst_6 = arith.constant dense<0.000000e+00> : vector<128xf32>
    %7 = vector.multi_reduction <add>, %2, %cst_6 [0] : vector<128x128xf32> to vector<128xf32>
    %8 = vector.shape_cast %7 : vector<128xf32> to vector<1x128xf32>
    %9 = arith.addf %6, %8 : vector<1x128xf32>
    %c0_7 = arith.constant 0 : index
    %c0_8 = arith.constant 0 : index
    %10 = vector.load %arg6[%c0_7, %c0_8] : memref<1x128xf32, #tpu.memory_space<vmem>>, vector<1x128xf32>
    tpu.vector_store %arg6[%c0_7, %c0_8], %9 {strides = array<i32>} : memref<1x128xf32, #tpu.memory_space<vmem>>, vector<1x128xf32>,
    %c0_9 = arith.constant 0 : index
    %c0_10 = arith.constant 0 : index
    %11 = vector.load %arg7[%c0_9, %c0_10] : memref<1x128xf32, #tpu.memory_space<vmem>>, vector<1x128xf32>
    %12 = arith.mulf %2, %2 : vector<128x128xf32>
    %cst_11 = arith.constant dense<0.000000e+00> : vector<128xf32>
    %13 = vector.multi_reduction <add>, %12, %cst_11 [0] : vector<128x128xf32> to vector<128xf32>
    %14 = vector.shape_cast %13 : vector<128xf32> to vector<1x128xf32>
    %15 = arith.addf %11, %14 : vector<1x128xf32>
    %c0_12 = arith.constant 0 : index
    %c0_13 = arith.constant 0 : index
    %16 = vector.load %arg7[%c0_12, %c0_13] : memref<1x128xf32, #tpu.memory_space<vmem>>, vector<1x128xf32>
    tpu.vector_store %arg7[%c0_12, %c0_13], %15 {strides = array<i32>} : memref<1x128xf32, #tpu.memory_space<vmem>>, vector<1x128xf32>,
    %c128_i32 = arith.constant 128 : i32
    %17 = arith.muli %arg0, %c128_i32 : i32
    %18 = tpu.assume_multiple %17, 128 : i32
    %19 = arith.truncf %2 : vector<128x128xf32> to vector<128x128xbf16>
    %20 = arith.index_cast %18 : i32 to index
    %c0_14 = arith.constant 0 : index
    %21 = vector.load %arg5[%20, %c0_14] : memref<128x128xbf16, #tpu.memory_space<vmem>>, vector<128x128xbf16>
    tpu.vector_store %arg5[%20, %c0_14], %19 {strides = array<i32>} : memref<128x128xbf16, #tpu.memory_space<vmem>>, vector<128x128xbf16>,
    %c0_i32_15 = arith.constant 0 : i32
    %22 = arith.cmpi eq, %arg0, %c0_i32_15 : i32
    %23 = arith.extui %22 : i1 to i32
    %c0_i32_16 = arith.constant 0 : i32
    %24 = arith.cmpi ne, %23, %c0_i32_16 : i32
    scf.if %24 {
      %c0_17 = arith.constant 0 : index
      %c0_18 = arith.constant 0 : index
      %25 = vector.load %arg6[%c0_17, %c0_18] : memref<1x128xf32, #tpu.memory_space<vmem>>, vector<1x128xf32>
      %cst_19 = arith.constant 7.812500e-03 : f32
      %26 = vector.broadcast %cst_19 : f32 to vector<1x128xf32>
      %27 = arith.mulf %25, %26 : vector<1x128xf32>
      %c0_20 = arith.constant 0 : index
      %c0_21 = arith.constant 0 : index
      %28 = vector.load %arg7[%c0_20, %c0_21] : memref<1x128xf32, #tpu.memory_space<vmem>>, vector<1x128xf32>
      %cst_22 = arith.constant 7.812500e-03 : f32
      %29 = vector.broadcast %cst_22 : f32 to vector<1x128xf32>
      %30 = arith.mulf %28, %29 : vector<1x128xf32>
      %31 = arith.mulf %27, %27 : vector<1x128xf32>
      %32 = arith.subf %30, %31 : vector<1x128xf32>
      %cst_23 = arith.constant 0.000000e+00 : f32
      %33 = vector.broadcast %cst_23 : f32 to vector<1x128xf32>
      %34 = arith.maximumf %32, %33 : vector<1x128xf32>
      %cst_24 = arith.constant 9.99999974E-6 : f32
      %35 = vector.broadcast %cst_24 : f32 to vector<1x128xf32>
      %36 = arith.addf %34, %35 : vector<1x128xf32>
      %37 = math.rsqrt %36 : vector<1x128xf32>
      %c0_25 = arith.constant 0 : index
      %c0_26 = arith.constant 0 : index
      %38 = vector.load %arg3[%c0_25, %c0_26] : memref<1x128xf32, #tpu.memory_space<vmem>>, vector<1x128xf32>
      %39 = arith.mulf %38, %37 : vector<1x128xf32>
      %c0_27 = arith.constant 0 : index
      %c0_28 = arith.constant 0 : index
      %40 = vector.load %arg4[%c0_27, %c0_28] : memref<1x128xf32, #tpu.memory_space<vmem>>, vector<1x128xf32>
      %41 = arith.mulf %27, %39 : vector<1x128xf32>
      %42 = arith.subf %40, %41 : vector<1x128xf32>
      %c0_29 = arith.constant 0 : index
      %c0_30 = arith.constant 0 : index
      %43 = vector.load %arg5[%c0_29, %c0_30] : memref<128x128xbf16, #tpu.memory_space<vmem>>, vector<128x128xbf16>
      %44 = arith.extf %43 : vector<128x128xbf16> to vector<128x128xf32>
      %45 = vector.broadcast %39 : vector<1x128xf32> to vector<128x128xf32>
      %46 = arith.mulf %44, %45 : vector<128x128xf32>
      %47 = vector.broadcast %42 : vector<1x128xf32> to vector<128x128xf32>
      %48 = arith.addf %46, %47 : vector<128x128xf32>
      %cst_31 = arith.constant 0.000000e+00 : f32
      %49 = vector.broadcast %cst_31 : f32 to vector<128x128xf32>
      %50 = arith.maximumf %48, %49 : vector<128x128xf32>
      %51 = arith.truncf %50 : vector<128x128xf32> to vector<128x128xbf16>
      %c0_32 = arith.constant 0 : index
      %c0_33 = arith.constant 0 : index
      %52 = vector.load %arg5[%c0_32, %c0_33] : memref<128x128xbf16, #tpu.memory_space<vmem>>, vector<128x128xbf16>
      tpu.vector_store %arg5[%c0_32, %c0_33], %51 {strides = array<i32>} : memref<128x128xbf16, #tpu.memory_space<vmem>>, vector<128x128xbf16>,
    } else {
    }
    return
  }
  func.func @transform_0(%arg0: i32) -> (i32, i32) {
    %c0_i32 = arith.constant 0 : i32
    %c0_i32_0 = arith.constant 0 : i32
    return %arg0, %c0_i32 : i32, i32
  }
  func.func @transform_1(%arg0: i32) -> (i32, i32) {
    %c0_i32 = arith.constant 0 : i32
    %c0_i32_0 = arith.constant 0 : i32
    %c0_i32_1 = arith.constant 0 : i32
    return %c0_i32, %c0_i32_0 : i32, i32
  }
  func.func @transform_2(%arg0: i32) -> (i32, i32) {
    %c0_i32 = arith.constant 0 : i32
    %c0_i32_0 = arith.constant 0 : i32
    %c0_i32_1 = arith.constant 0 : i32
    return %c0_i32, %c0_i32_0 : i32, i32
  }
  func.func @transform_3(%arg0: i32) -> (i32, i32) {
    %c0_i32 = arith.constant 0 : i32
    %c0_i32_0 = arith.constant 0 : i32
    %c0_i32_1 = arith.constant 0 : i32
    return %c0_i32, %c0_i32_0 : i32, i32
  }
  func.func @transform_4(%arg0: i32) -> (i32, i32) {
    %c0_i32 = arith.constant 0 : i32
    %c0_i32_0 = arith.constant 0 : i32
    %c0_i32_1 = arith.constant 0 : i32
    return %c0_i32, %c0_i32_0 : i32, i32
  }
}

module attributes {stable_mosaic.version = 11 : i64} {
  func.func @kernel(%arg0: i32, %arg1: memref<128x128xbf16, #tpu.memory_space<vmem>>, %arg2: memref<128x128xbf16, #tpu.memory_space<vmem>>, %arg3: memref<1x128xf32, #tpu.memory_space<vmem>>, %arg4: memref<1x128xf32, #tpu.memory_space<vmem>>, %arg5: memref<128x128xbf16, #tpu.memory_space<vmem>>, %arg6: memref<1x128xf32, #tpu.memory_space<vmem>>, %arg7: memref<1x128xf32, #tpu.memory_space<vmem>>) attributes {dimension_semantics = [#tpu.dimension_semantics<arbitrary>], iteration_bounds = array<i64: 1>, scalar_prefetch = 0 : i64, scratch_operands = 2 : i64, tpu.core_type = #tpu.core_type<tc>, window_params = [{transform_indices = @transform_0, window_bounds = array<i64: 128, 128>}, {pipeline_mode = #tpu.pipeline_mode<synchronous>, transform_indices = @transform_1, window_bounds = array<i64: 128, 128>}, {pipeline_mode = #tpu.pipeline_mode<synchronous>, transform_indices = @transform_2, window_bounds = array<i64: 1, 128>}, {pipeline_mode = #tpu.pipeline_mode<synchronous>, transform_indices = @transform_3, window_bounds = array<i64: 1, 128>}, {pipeline_mode = #tpu.pipeline_mode<synchronous>, transform_indices = @transform_4, window_bounds = array<i64: 128, 128>}]} {
    %c0 = arith.constant 0 : index
    %c0_0 = arith.constant 0 : index
    %0 = vector.load %arg1[%c0, %c0_0] : memref<128x128xbf16, #tpu.memory_space<vmem>>, vector<128x128xbf16>
    %c0_1 = arith.constant 0 : index
    %c0_2 = arith.constant 0 : index
    %1 = vector.load %arg2[%c0_1, %c0_2] : memref<128x128xbf16, #tpu.memory_space<vmem>>, vector<128x128xbf16>
    %cst = arith.constant dense<0.000000e+00> : vector<128x128xf32>
    %2 = tpu.matmul %0, %1, %cst {dimension_numbers = #tpu.dot_dimension_numbers<[1], [0], [0], [1], [0, 0, 1, 1], [], []>} : vector<128x128xbf16>, vector<128x128xbf16>, vector<128x128xf32> -> vector<128x128xf32>
    %c0_i32 = arith.constant 0 : i32
    %3 = arith.cmpi eq, %arg0, %c0_i32 : i32
    %4 = arith.extui %3 : i1 to i32
    %c0_i32_3 = arith.constant 0 : i32
    %5 = arith.cmpi ne, %4, %c0_i32_3 : i32
    scf.if %5 {
      %cst_17 = arith.constant 0.000000e+00 : f32
      %25 = vector.broadcast %cst_17 : f32 to vector<1x128xf32>
      %c0_18 = arith.constant 0 : index
      %c0_19 = arith.constant 0 : index
      %26 = vector.load %arg6[%c0_18, %c0_19] : memref<1x128xf32, #tpu.memory_space<vmem>>, vector<1x128xf32>
      tpu.vector_store %arg6[%c0_18, %c0_19], %25 {strides = array<i32>} : memref<1x128xf32, #tpu.memory_space<vmem>>, vector<1x128xf32>,
      %cst_20 = arith.constant 0.000000e+00 : f32
      %27 = vector.broadcast %cst_20 : f32 to vector<1x128xf32>
      %c0_21 = arith.constant 0 : index
      %c0_22 = arith.constant 0 : index
      %28 = vector.load %arg7[%c0_21, %c0_22] : memref<1x128xf32, #tpu.memory_space<vmem>>, vector<1x128xf32>
      tpu.vector_store %arg7[%c0_21, %c0_22], %27 {strides = array<i32>} : memref<1x128xf32, #tpu.memory_space<vmem>>, vector<1x128xf32>,
    } else {
    }
    %c0_4 = arith.constant 0 : index
    %c0_5 = arith.constant 0 : index
    %6 = vector.load %arg6[%c0_4, %c0_5] : memref<1x128xf32, #tpu.memory_space<vmem>>, vector<1x128xf32>
    %cst_6 = arith.constant dense<0.000000e+00> : vector<128xf32>
    %7 = vector.multi_reduction <add>, %2, %cst_6 [0] : vector<128x128xf32> to vector<128xf32>
    %8 = vector.shape_cast %7 : vector<128xf32> to vector<1x128xf32>
    %9 = arith.addf %6, %8 : vector<1x128xf32>
    %c0_7 = arith.constant 0 : index
    %c0_8 = arith.constant 0 : index
    %10 = vector.load %arg6[%c0_7, %c0_8] : memref<1x128xf32, #tpu.memory_space<vmem>>, vector<1x128xf32>
    tpu.vector_store %arg6[%c0_7, %c0_8], %9 {strides = array<i32>} : memref<1x128xf32, #tpu.memory_space<vmem>>, vector<1x128xf32>,
    %c0_9 = arith.constant 0 : index
    %c0_10 = arith.constant 0 : index
    %11 = vector.load %arg7[%c0_9, %c0_10] : memref<1x128xf32, #tpu.memory_space<vmem>>, vector<1x128xf32>
    %12 = arith.mulf %2, %2 : vector<128x128xf32>
    %cst_11 = arith.constant dense<0.000000e+00> : vector<128xf32>
    %13 = vector.multi_reduction <add>, %12, %cst_11 [0] : vector<128x128xf32> to vector<128xf32>
    %14 = vector.shape_cast %13 : vector<128xf32> to vector<1x128xf32>
    %15 = arith.addf %11, %14 : vector<1x128xf32>
    %c0_12 = arith.constant 0 : index
    %c0_13 = arith.constant 0 : index
    %16 = vector.load %arg7[%c0_12, %c0_13] : memref<1x128xf32, #tpu.memory_space<vmem>>, vector<1x128xf32>
    tpu.vector_store %arg7[%c0_12, %c0_13], %15 {strides = array<i32>} : memref<1x128xf32, #tpu.memory_space<vmem>>, vector<1x128xf32>,
    %c128_i32 = arith.constant 128 : i32
    %17 = arith.muli %arg0, %c128_i32 : i32
    %18 = tpu.assume_multiple %17, 128 : i32
    %19 = arith.truncf %2 : vector<128x128xf32> to vector<128x128xbf16>
    %20 = arith.index_cast %18 : i32 to index
    %c0_14 = arith.constant 0 : index
    %21 = vector.load %arg5[%20, %c0_14] : memref<128x128xbf16, #tpu.memory_space<vmem>>, vector<128x128xbf16>
    tpu.vector_store %arg5[%20, %c0_14], %19 {strides = array<i32>} : memref<128x128xbf16, #tpu.memory_space<vmem>>, vector<128x128xbf16>,
    %c0_i32_15 = arith.constant 0 : i32
    %22 = arith.cmpi eq, %arg0, %c0_i32_15 : i32
    %23 = arith.extui %22 : i1 to i32
    %c0_i32_16 = arith.constant 0 : i32
    %24 = arith.cmpi ne, %23, %c0_i32_16 : i32
    scf.if %24 {
      %c0_17 = arith.constant 0 : index
      %c0_18 = arith.constant 0 : index
      %25 = vector.load %arg6[%c0_17, %c0_18] : memref<1x128xf32, #tpu.memory_space<vmem>>, vector<1x128xf32>
      %cst_19 = arith.constant 7.812500e-03 : f32
      %26 = vector.broadcast %cst_19 : f32 to vector<1x128xf32>
      %27 = arith.mulf %25, %26 : vector<1x128xf32>
      %c0_20 = arith.constant 0 : index
      %c0_21 = arith.constant 0 : index
      %28 = vector.load %arg7[%c0_20, %c0_21] : memref<1x128xf32, #tpu.memory_space<vmem>>, vector<1x128xf32>
      %cst_22 = arith.constant 7.812500e-03 : f32
      %29 = vector.broadcast %cst_22 : f32 to vector<1x128xf32>
      %30 = arith.mulf %28, %29 : vector<1x128xf32>
      %31 = arith.mulf %27, %27 : vector<1x128xf32>
      %32 = arith.subf %30, %31 : vector<1x128xf32>
      %cst_23 = arith.constant 0.000000e+00 : f32
      %33 = vector.broadcast %cst_23 : f32 to vector<1x128xf32>
      %34 = arith.maximumf %32, %33 : vector<1x128xf32>
      %cst_24 = arith.constant 9.99999974E-6 : f32
      %35 = vector.broadcast %cst_24 : f32 to vector<1x128xf32>
      %36 = arith.addf %34, %35 : vector<1x128xf32>
      %37 = math.rsqrt %36 : vector<1x128xf32>
      %c0_25 = arith.constant 0 : index
      %c0_26 = arith.constant 0 : index
      %38 = vector.load %arg3[%c0_25, %c0_26] : memref<1x128xf32, #tpu.memory_space<vmem>>, vector<1x128xf32>
      %39 = arith.mulf %38, %37 : vector<1x128xf32>
      %c0_27 = arith.constant 0 : index
      %c0_28 = arith.constant 0 : index
      %40 = vector.load %arg4[%c0_27, %c0_28] : memref<1x128xf32, #tpu.memory_space<vmem>>, vector<1x128xf32>
      %41 = arith.mulf %27, %39 : vector<1x128xf32>
      %42 = arith.subf %40, %41 : vector<1x128xf32>
      %c0_29 = arith.constant 0 : index
      %c0_30 = arith.constant 0 : index
      %43 = vector.load %arg5[%c0_29, %c0_30] : memref<128x128xbf16, #tpu.memory_space<vmem>>, vector<128x128xbf16>
      %44 = arith.extf %43 : vector<128x128xbf16> to vector<128x128xf32>
      %45 = vector.broadcast %39 : vector<1x128xf32> to vector<128x128xf32>
      %46 = arith.mulf %44, %45 : vector<128x128xf32>
      %47 = vector.broadcast %42 : vector<1x128xf32> to vector<128x128xf32>
      %48 = arith.addf %46, %47 : vector<128x128xf32>
      %49 = arith.truncf %48 : vector<128x128xf32> to vector<128x128xbf16>
      %c0_31 = arith.constant 0 : index
      %c0_32 = arith.constant 0 : index
      %50 = vector.load %arg5[%c0_31, %c0_32] : memref<128x128xbf16, #tpu.memory_space<vmem>>, vector<128x128xbf16>
      tpu.vector_store %arg5[%c0_31, %c0_32], %49 {strides = array<i32>} : memref<128x128xbf16, #tpu.memory_space<vmem>>, vector<128x128xbf16>,
    } else {
    }
    return
  }
  func.func @transform_0(%arg0: i32) -> (i32, i32) {
    %c0_i32 = arith.constant 0 : i32
    %c0_i32_0 = arith.constant 0 : i32
    return %arg0, %c0_i32 : i32, i32
  }
  func.func @transform_1(%arg0: i32) -> (i32, i32) {
    %c0_i32 = arith.constant 0 : i32
    %c0_i32_0 = arith.constant 0 : i32
    %c0_i32_1 = arith.constant 0 : i32
    return %c0_i32, %c0_i32_0 : i32, i32
  }
  func.func @transform_2(%arg0: i32) -> (i32, i32) {
    %c0_i32 = arith.constant 0 : i32
    %c0_i32_0 = arith.constant 0 : i32
    %c0_i32_1 = arith.constant 0 : i32
    return %c0_i32, %c0_i32_0 : i32, i32
  }
  func.func @transform_3(%arg0: i32) -> (i32, i32) {
    %c0_i32 = arith.constant 0 : i32
    %c0_i32_0 = arith.constant 0 : i32
    %c0_i32_1 = arith.constant 0 : i32
    return %c0_i32, %c0_i32_0 : i32, i32
  }
  func.func @transform_4(%arg0: i32) -> (i32, i32) {
    %c0_i32 = arith.constant 0 : i32
    %c0_i32_0 = arith.constant 0 : i32
    %c0_i32_1 = arith.constant 0 : i32
    return %c0_i32, %c0_i32_0 : i32, i32
  }
}

module attributes {stable_mosaic.version = 11 : i64} {
  func.func @kernel(%arg0: i32, %arg1: memref<128x128xbf16, #tpu.memory_space<vmem>>, %arg2: memref<128x128xbf16, #tpu.memory_space<vmem>>, %arg3: memref<1x128xf32, #tpu.memory_space<vmem>>, %arg4: memref<1x128xf32, #tpu.memory_space<vmem>>, %arg5: memref<128x128xbf16, #tpu.memory_space<vmem>>, %arg6: memref<128x128xbf16, #tpu.memory_space<vmem>>, %arg7: memref<1x128xf32, #tpu.memory_space<vmem>>, %arg8: memref<1x128xf32, #tpu.memory_space<vmem>>) attributes {dimension_semantics = [#tpu.dimension_semantics<arbitrary>], iteration_bounds = array<i64: 1>, scalar_prefetch = 0 : i64, scratch_operands = 2 : i64, tpu.core_type = #tpu.core_type<tc>, window_params = [{transform_indices = @transform_0, window_bounds = array<i64: 128, 128>}, {pipeline_mode = #tpu.pipeline_mode<synchronous>, transform_indices = @transform_1, window_bounds = array<i64: 128, 128>}, {pipeline_mode = #tpu.pipeline_mode<synchronous>, transform_indices = @transform_2, window_bounds = array<i64: 1, 128>}, {pipeline_mode = #tpu.pipeline_mode<synchronous>, transform_indices = @transform_3, window_bounds = array<i64: 1, 128>}, {pipeline_mode = #tpu.pipeline_mode<synchronous>, transform_indices = @transform_4, window_bounds = array<i64: 128, 128>}, {pipeline_mode = #tpu.pipeline_mode<synchronous>, transform_indices = @transform_5, window_bounds = array<i64: 128, 128>}]} {
    %c0 = arith.constant 0 : index
    %c0_0 = arith.constant 0 : index
    %0 = vector.load %arg1[%c0, %c0_0] : memref<128x128xbf16, #tpu.memory_space<vmem>>, vector<128x128xbf16>
    %c0_1 = arith.constant 0 : index
    %c0_2 = arith.constant 0 : index
    %1 = vector.load %arg2[%c0_1, %c0_2] : memref<128x128xbf16, #tpu.memory_space<vmem>>, vector<128x128xbf16>
    %cst = arith.constant dense<0.000000e+00> : vector<128x128xf32>
    %2 = tpu.matmul %0, %1, %cst {dimension_numbers = #tpu.dot_dimension_numbers<[1], [0], [0], [1], [0, 0, 1, 1], [], []>} : vector<128x128xbf16>, vector<128x128xbf16>, vector<128x128xf32> -> vector<128x128xf32>
    %c0_i32 = arith.constant 0 : i32
    %3 = arith.cmpi eq, %arg0, %c0_i32 : i32
    %4 = arith.extui %3 : i1 to i32
    %c0_i32_3 = arith.constant 0 : i32
    %5 = arith.cmpi ne, %4, %c0_i32_3 : i32
    scf.if %5 {
      %cst_17 = arith.constant 0.000000e+00 : f32
      %25 = vector.broadcast %cst_17 : f32 to vector<1x128xf32>
      %c0_18 = arith.constant 0 : index
      %c0_19 = arith.constant 0 : index
      %26 = vector.load %arg7[%c0_18, %c0_19] : memref<1x128xf32, #tpu.memory_space<vmem>>, vector<1x128xf32>
      tpu.vector_store %arg7[%c0_18, %c0_19], %25 {strides = array<i32>} : memref<1x128xf32, #tpu.memory_space<vmem>>, vector<1x128xf32>,
      %cst_20 = arith.constant 0.000000e+00 : f32
      %27 = vector.broadcast %cst_20 : f32 to vector<1x128xf32>
      %c0_21 = arith.constant 0 : index
      %c0_22 = arith.constant 0 : index
      %28 = vector.load %arg8[%c0_21, %c0_22] : memref<1x128xf32, #tpu.memory_space<vmem>>, vector<1x128xf32>
      tpu.vector_store %arg8[%c0_21, %c0_22], %27 {strides = array<i32>} : memref<1x128xf32, #tpu.memory_space<vmem>>, vector<1x128xf32>,
    } else {
    }
    %c0_4 = arith.constant 0 : index
    %c0_5 = arith.constant 0 : index
    %6 = vector.load %arg7[%c0_4, %c0_5] : memref<1x128xf32, #tpu.memory_space<vmem>>, vector<1x128xf32>
    %cst_6 = arith.constant dense<0.000000e+00> : vector<128xf32>
    %7 = vector.multi_reduction <add>, %2, %cst_6 [0] : vector<128x128xf32> to vector<128xf32>
    %8 = vector.shape_cast %7 : vector<128xf32> to vector<1x128xf32>
    %9 = arith.addf %6, %8 : vector<1x128xf32>
    %c0_7 = arith.constant 0 : index
    %c0_8 = arith.constant 0 : index
    %10 = vector.load %arg7[%c0_7, %c0_8] : memref<1x128xf32, #tpu.memory_space<vmem>>, vector<1x128xf32>
    tpu.vector_store %arg7[%c0_7, %c0_8], %9 {strides = array<i32>} : memref<1x128xf32, #tpu.memory_space<vmem>>, vector<1x128xf32>,
    %c0_9 = arith.constant 0 : index
    %c0_10 = arith.constant 0 : index
    %11 = vector.load %arg8[%c0_9, %c0_10] : memref<1x128xf32, #tpu.memory_space<vmem>>, vector<1x128xf32>
    %12 = arith.mulf %2, %2 : vector<128x128xf32>
    %cst_11 = arith.constant dense<0.000000e+00> : vector<128xf32>
    %13 = vector.multi_reduction <add>, %12, %cst_11 [0] : vector<128x128xf32> to vector<128xf32>
    %14 = vector.shape_cast %13 : vector<128xf32> to vector<1x128xf32>
    %15 = arith.addf %11, %14 : vector<1x128xf32>
    %c0_12 = arith.constant 0 : index
    %c0_13 = arith.constant 0 : index
    %16 = vector.load %arg8[%c0_12, %c0_13] : memref<1x128xf32, #tpu.memory_space<vmem>>, vector<1x128xf32>
    tpu.vector_store %arg8[%c0_12, %c0_13], %15 {strides = array<i32>} : memref<1x128xf32, #tpu.memory_space<vmem>>, vector<1x128xf32>,
    %c128_i32 = arith.constant 128 : i32
    %17 = arith.muli %arg0, %c128_i32 : i32
    %18 = tpu.assume_multiple %17, 128 : i32
    %19 = arith.truncf %2 : vector<128x128xf32> to vector<128x128xbf16>
    %20 = arith.index_cast %18 : i32 to index
    %c0_14 = arith.constant 0 : index
    %21 = vector.load %arg6[%20, %c0_14] : memref<128x128xbf16, #tpu.memory_space<vmem>>, vector<128x128xbf16>
    tpu.vector_store %arg6[%20, %c0_14], %19 {strides = array<i32>} : memref<128x128xbf16, #tpu.memory_space<vmem>>, vector<128x128xbf16>,
    %c0_i32_15 = arith.constant 0 : i32
    %22 = arith.cmpi eq, %arg0, %c0_i32_15 : i32
    %23 = arith.extui %22 : i1 to i32
    %c0_i32_16 = arith.constant 0 : i32
    %24 = arith.cmpi ne, %23, %c0_i32_16 : i32
    scf.if %24 {
      %c0_17 = arith.constant 0 : index
      %c0_18 = arith.constant 0 : index
      %25 = vector.load %arg7[%c0_17, %c0_18] : memref<1x128xf32, #tpu.memory_space<vmem>>, vector<1x128xf32>
      %cst_19 = arith.constant 7.812500e-03 : f32
      %26 = vector.broadcast %cst_19 : f32 to vector<1x128xf32>
      %27 = arith.mulf %25, %26 : vector<1x128xf32>
      %c0_20 = arith.constant 0 : index
      %c0_21 = arith.constant 0 : index
      %28 = vector.load %arg8[%c0_20, %c0_21] : memref<1x128xf32, #tpu.memory_space<vmem>>, vector<1x128xf32>
      %cst_22 = arith.constant 7.812500e-03 : f32
      %29 = vector.broadcast %cst_22 : f32 to vector<1x128xf32>
      %30 = arith.mulf %28, %29 : vector<1x128xf32>
      %31 = arith.mulf %27, %27 : vector<1x128xf32>
      %32 = arith.subf %30, %31 : vector<1x128xf32>
      %cst_23 = arith.constant 0.000000e+00 : f32
      %33 = vector.broadcast %cst_23 : f32 to vector<1x128xf32>
      %34 = arith.maximumf %32, %33 : vector<1x128xf32>
      %cst_24 = arith.constant 9.99999974E-6 : f32
      %35 = vector.broadcast %cst_24 : f32 to vector<1x128xf32>
      %36 = arith.addf %34, %35 : vector<1x128xf32>
      %37 = math.rsqrt %36 : vector<1x128xf32>
      %c0_25 = arith.constant 0 : index
      %c0_26 = arith.constant 0 : index
      %38 = vector.load %arg3[%c0_25, %c0_26] : memref<1x128xf32, #tpu.memory_space<vmem>>, vector<1x128xf32>
      %39 = arith.mulf %38, %37 : vector<1x128xf32>
      %c0_27 = arith.constant 0 : index
      %c0_28 = arith.constant 0 : index
      %40 = vector.load %arg4[%c0_27, %c0_28] : memref<1x128xf32, #tpu.memory_space<vmem>>, vector<1x128xf32>
      %41 = arith.mulf %27, %39 : vector<1x128xf32>
      %42 = arith.subf %40, %41 : vector<1x128xf32>
      %c0_29 = arith.constant 0 : index
      %c0_30 = arith.constant 0 : index
      %43 = vector.load %arg6[%c0_29, %c0_30] : memref<128x128xbf16, #tpu.memory_space<vmem>>, vector<128x128xbf16>
      %44 = arith.extf %43 : vector<128x128xbf16> to vector<128x128xf32>
      %45 = vector.broadcast %39 : vector<1x128xf32> to vector<128x128xf32>
      %46 = arith.mulf %44, %45 : vector<128x128xf32>
      %47 = vector.broadcast %42 : vector<1x128xf32> to vector<128x128xf32>
      %48 = arith.addf %46, %47 : vector<128x128xf32>
      %c0_31 = arith.constant 0 : index
      %c0_32 = arith.constant 0 : index
      %49 = vector.load %arg5[%c0_31, %c0_32] : memref<128x128xbf16, #tpu.memory_space<vmem>>, vector<128x128xbf16>
      %50 = arith.extf %49 : vector<128x128xbf16> to vector<128x128xf32>
      %51 = arith.addf %48, %50 : vector<128x128xf32>
      %cst_33 = arith.constant 0.000000e+00 : f32
      %52 = vector.broadcast %cst_33 : f32 to vector<128x128xf32>
      %53 = arith.maximumf %51, %52 : vector<128x128xf32>
      %54 = arith.truncf %53 : vector<128x128xf32> to vector<128x128xbf16>
      %c0_34 = arith.constant 0 : index
      %c0_35 = arith.constant 0 : index
      %55 = vector.load %arg6[%c0_34, %c0_35] : memref<128x128xbf16, #tpu.memory_space<vmem>>, vector<128x128xbf16>
      tpu.vector_store %arg6[%c0_34, %c0_35], %54 {strides = array<i32>} : memref<128x128xbf16, #tpu.memory_space<vmem>>, vector<128x128xbf16>,
    } else {
    }
    return
  }
  func.func @transform_0(%arg0: i32) -> (i32, i32) {
    %c0_i32 = arith.constant 0 : i32
    %c0_i32_0 = arith.constant 0 : i32
    return %arg0, %c0_i32 : i32, i32
  }
  func.func @transform_1(%arg0: i32) -> (i32, i32) {
    %c0_i32 = arith.constant 0 : i32
    %c0_i32_0 = arith.constant 0 : i32
    %c0_i32_1 = arith.constant 0 : i32
    return %c0_i32, %c0_i32_0 : i32, i32
  }
  func.func @transform_2(%arg0: i32) -> (i32, i32) {
    %c0_i32 = arith.constant 0 : i32
    %c0_i32_0 = arith.constant 0 : i32
    %c0_i32_1 = arith.constant 0 : i32
    return %c0_i32, %c0_i32_0 : i32, i32
  }
  func.func @transform_3(%arg0: i32) -> (i32, i32) {
    %c0_i32 = arith.constant 0 : i32
    %c0_i32_0 = arith.constant 0 : i32
    %c0_i32_1 = arith.constant 0 : i32
    return %c0_i32, %c0_i32_0 : i32, i32
  }
  func.func @transform_4(%arg0: i32) -> (i32, i32) {
    %c0_i32 = arith.constant 0 : i32
    %c0_i32_0 = arith.constant 0 : i32
    %c0_i32_1 = arith.constant 0 : i32
    return %c0_i32, %c0_i32_0 : i32, i32
  }
  func.func @transform_5(%arg0: i32) -> (i32, i32) {
    %c0_i32 = arith.constant 0 : i32
    %c0_i32_0 = arith.constant 0 : i32
    %c0_i32_1 = arith.constant 0 : i32
    return %c0_i32, %c0_i32_0 : i32, i32
  }
}

</mosaic_0001>

<llo_original>
// kernel: _lambda_.6
$region0: #{_lambda_.6}
  #allocation0 [shape = 'u32[]', space=smem, size = 0x4, offset = 0x4, fixed_abs, tag = 'smem constant byte address 0x4 - core index']
  #allocation1 [shape = 'u32[144,128]{1,0:T(1,128)}', space=vmem, size = 0x12000, scoped, tag = 'internal scratch']
  #allocation2 [shape = 'f32[1,128]{1,0:T(1,128)}', space=vmem, size = 0x200, scoped, tag = 'scratch operand']
  #allocation3 [shape = 'f32[1,128]{1,0:T(1,128)}', space=vmem, size = 0x200, scoped, tag = 'scratch operand']
  %s0 = inlined_call_operand.vmem [shape: bf16[128,128], index: 0, kind: input, shape index: {}]
  %s1 = inlined_call_operand.vmem [shape: bf16[128,128], index: 1, kind: input, shape index: {}]
  %s2 = inlined_call_operand.vmem [shape: f32[1,128], index: 2, kind: input, shape index: {}]
  %s3 = inlined_call_operand.vmem [shape: f32[1,128], index: 3, kind: input, shape index: {}]
  %s4 = inlined_call_operand.vmem [shape: bf16[128,128], index: 4, kind: output, shape index: {}]
  %s5 = sld [smem:[#allocation0]]
  $region34: #{_lambda_.6} parent=0
    _
  %s7 = ssub.s32 1, %s5
  %s8 = scalar_select 0, %s7, %s5
  // Predicated region
  $region2: #{_lambda_.6} parent=0 // pred_check
    _
  $region3: #{_lambda_.6} parent=0 // pred_check_branch
    %10 = sbr.rel (0) target = $region5
  $region4: #{_lambda_.6} parent=0 // pred_region
    _
  $region5: #{_lambda_.6} parent=0 // pred_fallthru
    _
  // Predicated region
  $region6: #{_lambda_.6} parent=0 // pred_check
    _
  $region7: #{_lambda_.6} parent=0 // pred_check_branch
    %12 = sbr.rel (0) target = $region9
  $region8: #{_lambda_.6} parent=0 // pred_region
    _
  $region9: #{_lambda_.6} parent=0 // pred_fallthru
    _
  // Predicated region
  $region10: #{_lambda_.6} parent=0 // pred_check
    _
  $region11: #{_lambda_.6} parent=0 // pred_check_branch
    %14 = sbr.rel (0) target = $region13
  $region12: #{_lambda_.6} parent=0 // pred_region
    _
  $region13: #{_lambda_.6} parent=0 // pred_fallthru
    _
  // Predicated region
  $region14: #{_lambda_.6} parent=0 // pred_check
    _
  $region15: #{_lambda_.6} parent=0 // pred_check_branch
    %16 = sbr.rel (0) target = $region17
  $region16: #{_lambda_.6} parent=0 // pred_region
    _
  $region17: #{_lambda_.6} parent=0 // pred_fallthru
    _
  %v18 = vld [vmem:[%s0] sm:$0xf]
  %v19 = vld [vmem:[%s0 + $0x4] sm:$0xf]
  %v20 = vld [vmem:[%s0 + $0x8] sm:$0xf]
  %v21 = vld [vmem:[%s0 + $0xc] sm:$0xf]
  %v22 = vld [vmem:[%s0 + $0x10] sm:$0xf]
  %v23 = vld [vmem:[%s0 + $0x14] sm:$0xf]
  %v24 = vld [vmem:[%s0 + $0x18] sm:$0xf]
  %v25 = vld [vmem:[%s0 + $0x1c] sm:$0xf]
  %v26 = vld [vmem:[%s0 + $0x20] sm:$0xf]
  %v27 = vld [vmem:[%s0 + $0x24] sm:$0xf]
  %v28 = vld [vmem:[%s0 + $0x28] sm:$0xf]
  %v29 = vld [vmem:[%s0 + $0x2c] sm:$0xf]
  %v30 = vld [vmem:[%s0 + $0x30] sm:$0xf]
  %v31 = vld [vmem:[%s0 + $0x34] sm:$0xf]
  %v32 = vld [vmem:[%s0 + $0x38] sm:$0xf]
  %v33 = vld [vmem:[%s0 + $0x3c] sm:$0xf]
  %v34 = vld [vmem:[%s1] sm:$0xf]
  %v35 = vld [vmem:[%s1 + $0x4] sm:$0xf]
  %v36 = vld [vmem:[%s1 + $0x8] sm:$0xf]
  %v37 = vld [vmem:[%s1 + $0xc] sm:$0xf]
  %v38 = vld [vmem:[%s1 + $0x10] sm:$0xf]
  %v39 = vld [vmem:[%s1 + $0x14] sm:$0xf]
  %v40 = vld [vmem:[%s1 + $0x18] sm:$0xf]
  %v41 = vld [vmem:[%s1 + $0x1c] sm:$0xf]
  %v42 = vld [vmem:[%s1 + $0x20] sm:$0xf]
  %v43 = vld [vmem:[%s1 + $0x24] sm:$0xf]
  %v44 = vld [vmem:[%s1 + $0x28] sm:$0xf]
  %v45 = vld [vmem:[%s1 + $0x2c] sm:$0xf]
  %v46 = vld [vmem:[%s1 + $0x30] sm:$0xf]
  %v47 = vld [vmem:[%s1 + $0x34] sm:$0xf]
  %v48 = vld [vmem:[%s1 + $0x38] sm:$0xf]
  %v49 = vld [vmem:[%s1 + $0x3c] sm:$0xf]
  %v66 = vunpack.c.l.b16 %v18
  %v67 = vunpack.c.l.b16 %v19
  %v68 = vunpack.c.l.b16 %v20
  %v69 = vunpack.c.l.b16 %v21
  %v70 = vunpack.c.l.b16 %v22
  %v71 = vunpack.c.l.b16 %v23
  %v72 = vunpack.c.l.b16 %v24
  %v73 = vunpack.c.l.b16 %v25
  %v74 = vunpack.c.l.b16 %v26
  %v75 = vunpack.c.l.b16 %v27
  %v76 = vunpack.c.l.b16 %v28
  %v77 = vunpack.c.l.b16 %v29
  %v78 = vunpack.c.l.b16 %v30
  %v79 = vunpack.c.l.b16 %v31
  %v80 = vunpack.c.l.b16 %v32
  %v81 = vunpack.c.l.b16 %v33
  %v82 = vpack.c.b16 %v67, %v66
  %v83 = vpack.c.b16 %v69, %v68
  %v84 = vpack.c.b16 %v71, %v70
  %v85 = vpack.c.b16 %v73, %v72
  %v86 = vpack.c.b16 %v75, %v74
  %v87 = vpack.c.b16 %v77, %v76
  %v88 = vpack.c.b16 %v79, %v78
  %v89 = vpack.c.b16 %v81, %v80
  %v114 = vunpack.c.l.b16 %v34
  %v115 = vunpack.c.l.b16 %v35
  %v116 = vunpack.c.l.b16 %v36
  %v117 = vunpack.c.l.b16 %v37
  %v118 = vunpack.c.l.b16 %v38
  %v119 = vunpack.c.l.b16 %v39
  %v120 = vunpack.c.l.b16 %v40
  %v121 = vunpack.c.l.b16 %v41
  %v122 = vunpack.c.l.b16 %v42
  %v123 = vunpack.c.l.b16 %v43
  %v124 = vunpack.c.l.b16 %v44
  %v125 = vunpack.c.l.b16 %v45
  %v126 = vunpack.c.l.b16 %v46
  %v127 = vunpack.c.l.b16 %v47
  %v128 = vunpack.c.l.b16 %v48
  %v129 = vunpack.c.l.b16 %v49
  %v130 = vpack.c.b16 %v115, %v114
  %v131 = vpack.c.b16 %v117, %v116
  %v132 = vpack.c.b16 %v119, %v118
  %v133 = vpack.c.b16 %v121, %v120
  %v134 = vpack.c.b16 %v123, %v122
  %v135 = vpack.c.b16 %v125, %v124
  %v136 = vpack.c.b16 %v127, %v126
  %v137 = vpack.c.b16 %v129, %v128
  %146 = vmatprep.subr.bf16.mxu0 0
  %147 = vmatpush1.bf16.msra.mxu0 %v137
  %148 = vmatprep.subr.bf16.mxu0 0
  %149 = vmatpush1.bf16.msra.mxu0 %v136
  %150 = vmatprep.subr.bf16.mxu0 0
  %151 = vmatpush1.bf16.msra.mxu0 %v135
  %152 = vmatprep.subr.bf16.mxu0 0
  %153 = vmatpush1.bf16.msra.mxu0 %v134
  %154 = vmatprep.subr.bf16.mxu0 0
  %155 = vmatpush1.bf16.msra.mxu0 %v133
  %156 = vmatprep.subr.bf16.mxu0 0
  %157 = vmatpush1.bf16.msra.mxu0 %v132
  %158 = vmatprep.subr.bf16.mxu0 0
  %159 = vmatpush1.bf16.msra.mxu0 %v131
  %160 = vmatprep.subr.bf16.mxu0 0
  %161 = vmatpush1.bf16.msra.mxu0 %v130
  %162 = vmatprep.subr.bf16.mxu0 0
  %163 = vmatpush2.bf16.msra.mxu0 0
  %164 = vmatprep.subr.bf16.mxu0 0
  %165 = vmatpush2.bf16.msra.mxu0 0
  %166 = vmatprep.subr.bf16.mxu0 0
  %167 = vmatpush2.bf16.msra.mxu0 0
  %168 = vmatprep.subr.bf16.mxu0 0
  %169 = vmatpush2.bf16.msra.mxu0 0
  %170 = vmatprep.subr.bf16.mxu0 0
  %171 = vmatpush2.bf16.msra.mxu0 0
  %172 = vmatprep.subr.bf16.mxu0 0
  %173 = vmatpush2.bf16.msra.mxu0 0
  %174 = vmatprep.subr.bf16.mxu0 0
  %175 = vmatpush2.bf16.msra.mxu0 0
  %176 = vmatprep.subr.bf16.mxu0 0
  %177 = vmatpush2.bf16.msra.mxu0 0
  %178 = vmatprep.mubr.bf16.mxu0 0
  %179 = vmatmul.mubr.bf16.gmra.mxu0 %v82
  %v180 = vpop.f32.mrf.mxu0
  %v181 = vadd.f32 0.0, %v180
  %v182 = vpop.f32.mrf.mxu0
  %v183 = vpop.f32.mrf.mxu0
  %v184 = vadd.f32 0.0, %v183
  %v185 = vpop.f32.mrf.mxu0
  %186 = vmatprep.mubr.bf16.mxu0 0
  %187 = vmatmul.mubr.bf16.gmra.mxu0 %v83
  %v188 = vpop.f32.mrf.mxu0
  %v189 = vadd.f32 0.0, %v188
  %v190 = vpop.f32.mrf.mxu0
  %v191 = vpop.f32.mrf.mxu0
  %v192 = vadd.f32 0.0, %v191
  %v193 = vpop.f32.mrf.mxu0
  %194 = vmatprep.mubr.bf16.mxu0 0
  %195 = vmatmul.mubr.bf16.gmra.mxu0 %v84
  %v196 = vpop.f32.mrf.mxu0
  %v197 = vadd.f32 0.0, %v196
  %v198 = vpop.f32.mrf.mxu0
  %v199 = vpop.f32.mrf.mxu0
  %v200 = vadd.f32 0.0, %v199
  %v201 = vpop.f32.mrf.mxu0
  %202 = vmatprep.mubr.bf16.mxu0 0
  %203 = vmatmul.mubr.bf16.gmra.mxu0 %v85
  %v204 = vpop.f32.mrf.mxu0
  %v205 = vadd.f32 0.0, %v204
  %v206 = vpop.f32.mrf.mxu0
  %v207 = vpop.f32.mrf.mxu0
  %v208 = vadd.f32 0.0, %v207
  %v209 = vpop.f32.mrf.mxu0
  %210 = vmatprep.mubr.bf16.mxu0 0
  %211 = vmatmul.mubr.bf16.gmra.mxu0 %v86
  %v212 = vpop.f32.mrf.mxu0
  %v213 = vadd.f32 0.0, %v212
  %v214 = vpop.f32.mrf.mxu0
  %v215 = vpop.f32.mrf.mxu0
  %v216 = vadd.f32 0.0, %v215
  %v217 = vpop.f32.mrf.mxu0
  %218 = vmatprep.mubr.bf16.mxu0 0
  %219 = vmatmul.mubr.bf16.gmra.mxu0 %v87
  %v220 = vpop.f32.mrf.mxu0
  %v221 = vadd.f32 0.0, %v220
  %v222 = vpop.f32.mrf.mxu0
  %v223 = vpop.f32.mrf.mxu0
  %v224 = vadd.f32 0.0, %v223
  %v225 = vpop.f32.mrf.mxu0
  %226 = vmatprep.mubr.bf16.mxu0 0
  %227 = vmatmul.mubr.bf16.gmra.mxu0 %v88
  %v228 = vpop.f32.mrf.mxu0
  %v229 = vadd.f32 0.0, %v228
  %v230 = vpop.f32.mrf.mxu0
  %v231 = vpop.f32.mrf.mxu0
  %v232 = vadd.f32 0.0, %v231
  %v233 = vpop.f32.mrf.mxu0
  %234 = vmatprep.mubr.bf16.mxu0 0
  %235 = vmatmul.mubr.bf16.gmra.mxu0 %v89
  %v236 = vpop.f32.mrf.mxu0
  %v237 = vadd.f32 0.0, %v236
  %v238 = vpop.f32.mrf.mxu0
  %v239 = vpop.f32.mrf.mxu0
  %v240 = vadd.f32 0.0, %v239
  %v241 = vpop.f32.mrf.mxu0
  %242 = vdwg.mxu0
  %p243 = scmp.eq.s32.totalorder 0, 0
  // Predicated region
  $region18: #{_lambda_.6} parent=0 // pred_check
    %p244 = pneg %p243
  $region19: #{_lambda_.6} parent=0 // pred_check_branch
    %246 = sbr.rel (%p244) target = $region21
  $region20: #{_lambda_.6} parent=0 // pred_region
    %247 = vst [vmem:[#allocation2] sm:$0x1] 0.0
    %248 = vst [vmem:[#allocation3] sm:$0x1] 0.0
  $region21: #{_lambda_.6} parent=0 // pred_fallthru
    _
  %v249 = vld [vmem:[#allocation2] sm:$0x1]
  %v250 = vadd.f32 %v181, %v184
  %v251 = vadd.f32 %v250, %v189
  %v252 = vadd.f32 %v251, %v192
  %v253 = vadd.f32 %v252, %v197
  %v254 = vadd.f32 %v253, %v200
  %v255 = vadd.f32 %v254, %v205
  %v256 = vadd.f32 %v255, %v208
  %v257 = vadd.f32 %v256, %v213
  %v258 = vadd.f32 %v257, %v216
  %v259 = vadd.f32 %v258, %v221
  %v260 = vadd.f32 %v259, %v224
  %v261 = vadd.f32 %v260, %v229
  %v262 = vadd.f32 %v261, %v232
  %v263 = vadd.f32 %v262, %v237
  %v264 = vadd.f32 %v263, %v240
  %v265 = vrot.slane %v264, 4
  %v266 = vadd.f32 %v264, %v265
  %v267 = vrot.slane %v266, 2
  %v268 = vadd.f32 %v266, %v267
  %v269 = vrot.slane %v268, 1
  %v270 = vadd.f32 %v268, %v269
  %v271 = vadd.f32 %v249, %v270
  %272 = vst [vmem:[#allocation2] sm:$0x1] %v271
  %v273 = vld [vmem:[#allocation3] sm:$0x1]
  %v274 = vmul.f32 %v181, %v181
  %v275 = vmul.f32 %v184, %v184
  %v276 = vmul.f32 %v189, %v189
  %v277 = vmul.f32 %v192, %v192
  %v278 = vmul.f32 %v197, %v197
  %v279 = vmul.f32 %v200, %v200
  %v280 = vmul.f32 %v205, %v205
  %v281 = vmul.f32 %v208, %v208
  %v282 = vmul.f32 %v213, %v213
  %v283 = vmul.f32 %v216, %v216
  %v284 = vmul.f32 %v221, %v221
  %v285 = vmul.f32 %v224, %v224
  %v286 = vmul.f32 %v229, %v229
  %v287 = vmul.f32 %v232, %v232
  %v288 = vmul.f32 %v237, %v237
  %v289 = vmul.f32 %v240, %v240
  %v290 = vadd.f32 %v274, %v275
  %v291 = vadd.f32 %v290, %v276
  %v292 = vadd.f32 %v291, %v277
  %v293 = vadd.f32 %v292, %v278
  %v294 = vadd.f32 %v293, %v279
  %v295 = vadd.f32 %v294, %v280
  %v296 = vadd.f32 %v295, %v281
  %v297 = vadd.f32 %v296, %v282
  %v298 = vadd.f32 %v297, %v283
  %v299 = vadd.f32 %v298, %v284
  %v300 = vadd.f32 %v299, %v285
  %v301 = vadd.f32 %v300, %v286
  %v302 = vadd.f32 %v301, %v287
  %v303 = vadd.f32 %v302, %v288
  %v304 = vadd.f32 %v303, %v289
  %v305 = vrot.slane %v304, 4
  %v306 = vadd.f32 %v304, %v305
  %v307 = vrot.slane %v306, 2
  %v308 = vadd.f32 %v306, %v307
  %v309 = vrot.slane %v308, 1
  %v310 = vadd.f32 %v308, %v309
  %v311 = vadd.f32 %v273, %v310
  %312 = vst [vmem:[#allocation3] sm:$0x1] %v311
  %s313 = smul.u32 0, 128
  %v314 = vpack.c.bf16 %v184, %v181
  %v315 = vpack.c.bf16 %v192, %v189
  %v316 = vpack.c.bf16 %v200, %v197
  %v317 = vpack.c.bf16 %v208, %v205
  %v318 = vpack.c.bf16 %v216, %v213
  %v319 = vpack.c.bf16 %v224, %v221
  %v320 = vpack.c.bf16 %v232, %v229
  %v321 = vpack.c.bf16 %v240, %v237
  %v330 = vunpack.c.l.b16 %v314
  %v331 = vunpack.c.h.b16 %v314
  %v332 = vunpack.c.l.b16 %v315
  %v333 = vunpack.c.h.b16 %v315
  %v334 = vunpack.c.l.b16 %v316
  %v335 = vunpack.c.h.b16 %v316
  %v336 = vunpack.c.l.b16 %v317
  %v337 = vunpack.c.h.b16 %v317
  %v338 = vunpack.c.l.b16 %v318
  %v339 = vunpack.c.h.b16 %v318
  %v340 = vunpack.c.l.b16 %v319
  %v341 = vunpack.c.h.b16 %v319
  %v342 = vunpack.c.l.b16 %v320
  %v343 = vunpack.c.h.b16 %v320
  %v344 = vunpack.c.l.b16 %v321
  %v345 = vunpack.c.h.b16 %v321
  %v346 = vpack.c.b16 %v330, %v330
  %v347 = vpack.c.b16 %v331, %v331
  %v348 = vpack.c.b16 %v332, %v332
  %v349 = vpack.c.b16 %v333, %v333
  %v350 = vpack.c.b16 %v334, %v334
  %v351 = vpack.c.b16 %v335, %v335
  %v352 = vpack.c.b16 %v336, %v336
  %v353 = vpack.c.b16 %v337, %v337
  %v354 = vpack.c.b16 %v338, %v338
  %v355 = vpack.c.b16 %v339, %v339
  %v356 = vpack.c.b16 %v340, %v340
  %v357 = vpack.c.b16 %v341, %v341
  %v358 = vpack.c.b16 %v342, %v342
  %v359 = vpack.c.b16 %v343, %v343
  %v360 = vpack.c.b16 %v344, %v344
  %v361 = vpack.c.b16 %v345, %v345
  %s378 = sshra.s32 %s313, 3
  %s379 = sand.u32 %s313, 7
  %s380 = smul.addr %s378, 4
  %s381 = scalar_lea.vmem %s4, %s380
  %382 = vst [vmem:[%s381] sm:$0xf] %v346
  %383 = vst [vmem:[%s381 + $0x4] sm:$0xf] %v347
  %384 = vst [vmem:[%s381 + $0x8] sm:$0xf] %v348
  %385 = vst [vmem:[%s381 + $0xc] sm:$0xf] %v349
  %386 = vst [vmem:[%s381 + $0x10] sm:$0xf] %v350
  %387 = vst [vmem:[%s381 + $0x14] sm:$0xf] %v351
  %388 = vst [vmem:[%s381 + $0x18] sm:$0xf] %v352
  %389 = vst [vmem:[%s381 + $0x1c] sm:$0xf] %v353
  %390 = vst [vmem:[%s381 + $0x20] sm:$0xf] %v354
  %391 = vst [vmem:[%s381 + $0x24] sm:$0xf] %v355
  %392 = vst [vmem:[%s381 + $0x28] sm:$0xf] %v356
  %393 = vst [vmem:[%s381 + $0x2c] sm:$0xf] %v357
  %394 = vst [vmem:[%s381 + $0x30] sm:$0xf] %v358
  %395 = vst [vmem:[%s381 + $0x34] sm:$0xf] %v359
  %396 = vst [vmem:[%s381 + $0x38] sm:$0xf] %v360
  %397 = vst [vmem:[%s381 + $0x3c] sm:$0xf] %v361
  // Predicated region
  $region22: #{_lambda_.6} parent=0 // pred_check
    %p398 = pneg %p243
  $region23: #{_lambda_.6} parent=0 // pred_check_branch
    %400 = sbr.rel (%p398) target = $region25
  $region24: #{_lambda_.6} parent=0 // pred_region
    %v401 = vld [vmem:[#allocation2] sm:$0x1]
    %v402 = vmul.f32 %v401, 0.0078125
    %v403 = vld [vmem:[#allocation3] sm:$0x1]
    %v404 = vmul.f32 %v403, 0.0078125
    %v405 = vmul.f32 %v402, %v402
    %v406 = vsub.f32 %v404, %v405
    %v407 = vmax.f32 %v406, 0.0
    %v408 = vadd.f32 %v407, 1e-05
    %v409 = vrsqrt.pop %v408
    %v410 = vld [vmem:[%s2] sm:$0x1]
    %v411 = vmul.f32 %v410, %v409
    %v412 = vld [vmem:[%s3] sm:$0x1]
    %v413 = vmul.f32 %v402, %v411
    %v414 = vsub.f32 %v412, %v413
    %v415 = vld [vmem:[%s4] sm:$0xf]
    %v416 = vld [vmem:[%s4 + $0x4] sm:$0xf]
    %v417 = vld [vmem:[%s4 + $0x8] sm:$0xf]
    %v418 = vld [vmem:[%s4 + $0xc] sm:$0xf]
    %v419 = vld [vmem:[%s4 + $0x10] sm:$0xf]
    %v420 = vld [vmem:[%s4 + $0x14] sm:$0xf]
    %v421 = vld [vmem:[%s4 + $0x18] sm:$0xf]
    %v422 = vld [vmem:[%s4 + $0x1c] sm:$0xf]
    %v423 = vld [vmem:[%s4 + $0x20] sm:$0xf]
    %v424 = vld [vmem:[%s4 + $0x24] sm:$0xf]
    %v425 = vld [vmem:[%s4 + $0x28] sm:$0xf]
    %v426 = vld [vmem:[%s4 + $0x2c] sm:$0xf]
    %v427 = vld [vmem:[%s4 + $0x30] sm:$0xf]
    %v428 = vld [vmem:[%s4 + $0x34] sm:$0xf]
    %v429 = vld [vmem:[%s4 + $0x38] sm:$0xf]
    %v430 = vld [vmem:[%s4 + $0x3c] sm:$0xf]
    %v431 = vunpack.c.l.bf16 %v415
    %v432 = vunpack.c.l.bf16 %v416
    %v433 = vunpack.c.l.bf16 %v417
    %v434 = vunpack.c.l.bf16 %v418
    %v435 = vunpack.c.l.bf16 %v419
    %v436 = vunpack.c.l.bf16 %v420
    %v437 = vunpack.c.l.bf16 %v421
    %v438 = vunpack.c.l.bf16 %v422
    %v439 = vunpack.c.l.bf16 %v423
    %v440 = vunpack.c.l.bf16 %v424
    %v441 = vunpack.c.l.bf16 %v425
    %v442 = vunpack.c.l.bf16 %v426
    %v443 = vunpack.c.l.bf16 %v427
    %v444 = vunpack.c.l.bf16 %v428
    %v445 = vunpack.c.l.bf16 %v429
    %v446 = vunpack.c.l.bf16 %v430
    %v448 = vlaneseq
    %v449 = vshrl.u32 %v448, 7
    %v450 = vsub.s32 0, %v449
    %v451 = vrot.slane %v411, %v450
    %v453 = vmul.f32 %v431, %v451
    %v454 = vmul.f32 %v432, %v451
    %v455 = vmul.f32 %v433, %v451
    %v456 = vmul.f32 %v434, %v451
    %v457 = vmul.f32 %v435, %v451
    %v458 = vmul.f32 %v436, %v451
    %v459 = vmul.f32 %v437, %v451
    %v460 = vmul.f32 %v438, %v451
    %v461 = vmul.f32 %v439, %v451
    %v462 = vmul.f32 %v440, %v451
    %v463 = vmul.f32 %v441, %v451
    %v464 = vmul.f32 %v442, %v451
    %v465 = vmul.f32 %v443, %v451
    %v466 = vmul.f32 %v444, %v451
    %v467 = vmul.f32 %v445, %v451
    %v468 = vmul.f32 %v446, %v451
    %v470 = vlaneseq
    %v471 = vshrl.u32 %v470, 7
    %v472 = vsub.s32 0, %v471
    %v473 = vrot.slane %v414, %v472
    %v475 = vadd.f32 %v453, %v473
    %v476 = vadd.f32 %v454, %v473
    %v477 = vadd.f32 %v455, %v473
    %v478 = vadd.f32 %v456, %v473
    %v479 = vadd.f32 %v457, %v473
    %v480 = vadd.f32 %v458, %v473
    %v481 = vadd.f32 %v459, %v473
    %v482 = vadd.f32 %v460, %v473
    %v483 = vadd.f32 %v461, %v473
    %v484 = vadd.f32 %v462, %v473
    %v485 = vadd.f32 %v463, %v473
    %v486 = vadd.f32 %v464, %v473
    %v487 = vadd.f32 %v465, %v473
    %v488 = vadd.f32 %v466, %v473
    %v489 = vadd.f32 %v467, %v473
    %v490 = vadd.f32 %v468, %v473
    %v491 = vpack.c.bf16 %v476, %v475
    %v492 = vpack.c.bf16 %v478, %v477
    %v493 = vpack.c.bf16 %v480, %v479
    %v494 = vpack.c.bf16 %v482, %v481
    %v495 = vpack.c.bf16 %v484, %v483
    %v496 = vpack.c.bf16 %v486, %v485
    %v497 = vpack.c.bf16 %v488, %v487
    %v498 = vpack.c.bf16 %v490, %v489
    %v507 = vunpack.c.l.b16 %v491
    %v508 = vunpack.c.h.b16 %v491
    %v509 = vunpack.c.l.b16 %v492
    %v510 = vunpack.c.h.b16 %v492
    %v511 = vunpack.c.l.b16 %v493
    %v512 = vunpack.c.h.b16 %v493
    %v513 = vunpack.c.l.b16 %v494
    %v514 = vunpack.c.h.b16 %v494
    %v515 = vunpack.c.l.b16 %v495
    %v516 = vunpack.c.h.b16 %v495
    %v517 = vunpack.c.l.b16 %v496
    %v518 = vunpack.c.h.b16 %v496
    %v519 = vunpack.c.l.b16 %v497
    %v520 = vunpack.c.h.b16 %v497
    %v521 = vunpack.c.l.b16 %v498
    %v522 = vunpack.c.h.b16 %v498
    %v523 = vpack.c.b16 %v507, %v507
    %v524 = vpack.c.b16 %v508, %v508
    %v525 = vpack.c.b16 %v509, %v509
    %v526 = vpack.c.b16 %v510, %v510
    %v527 = vpack.c.b16 %v511, %v511
    %v528 = vpack.c.b16 %v512, %v512
    %v529 = vpack.c.b16 %v513, %v513
    %v530 = vpack.c.b16 %v514, %v514
    %v531 = vpack.c.b16 %v515, %v515
    %v532 = vpack.c.b16 %v516, %v516
    %v533 = vpack.c.b16 %v517, %v517
    %v534 = vpack.c.b16 %v518, %v518
    %v535 = vpack.c.b16 %v519, %v519
    %v536 = vpack.c.b16 %v520, %v520
    %v537 = vpack.c.b16 %v521, %v521
    %v538 = vpack.c.b16 %v522, %v522
    %555 = vst [vmem:[%s4] sm:$0xf] %v523
    %556 = vst [vmem:[%s4 + $0x4] sm:$0xf] %v524
    %557 = vst [vmem:[%s4 + $0x8] sm:$0xf] %v525
    %558 = vst [vmem:[%s4 + $0xc] sm:$0xf] %v526
    %559 = vst [vmem:[%s4 + $0x10] sm:$0xf] %v527
    %560 = vst [vmem:[%s4 + $0x14] sm:$0xf] %v528
    %561 = vst [vmem:[%s4 + $0x18] sm:$0xf] %v529
    %562 = vst [vmem:[%s4 + $0x1c] sm:$0xf] %v530
    %563 = vst [vmem:[%s4 + $0x20] sm:$0xf] %v531
    %564 = vst [vmem:[%s4 + $0x24] sm:$0xf] %v532
    %565 = vst [vmem:[%s4 + $0x28] sm:$0xf] %v533
    %566 = vst [vmem:[%s4 + $0x2c] sm:$0xf] %v534
    %567 = vst [vmem:[%s4 + $0x30] sm:$0xf] %v535
    %568 = vst [vmem:[%s4 + $0x34] sm:$0xf] %v536
    %569 = vst [vmem:[%s4 + $0x38] sm:$0xf] %v537
    %570 = vst [vmem:[%s4 + $0x3c] sm:$0xf] %v538
  $region25: #{_lambda_.6} parent=0 // pred_fallthru
    _
  // Predicated region
  $region26: #{_lambda_.6} parent=0 // pred_check
    _
  $region27: #{_lambda_.6} parent=0 // pred_check_branch
    %572 = sbr.rel (0) target = $region29
  $region28: #{_lambda_.6} parent=0 // pred_region
    _
  $region29: #{_lambda_.6} parent=0 // pred_fallthru
    _
  // Predicated region
  $region30: #{_lambda_.6} parent=0 // pred_check
    _
  $region31: #{_lambda_.6} parent=0 // pred_check_branch
    %574 = sbr.rel (0) target = $region33
  $region32: #{_lambda_.6} parent=0 // pred_region
    _
  $region33: #{_lambda_.6} parent=0 // pred_fallthru
    _

// kernel: _lambda_.5
$region0: #{_lambda_.5}
  #allocation0 [shape = 'u32[]', space=smem, size = 0x4, offset = 0x4, fixed_abs, tag = 'smem constant byte address 0x4 - core index']
  #allocation1 [shape = 'u32[144,128]{1,0:T(1,128)}', space=vmem, size = 0x12000, scoped, tag = 'internal scratch']
  #allocation2 [shape = 'f32[1,128]{1,0:T(1,128)}', space=vmem, size = 0x200, scoped, tag = 'scratch operand']
  #allocation3 [shape = 'f32[1,128]{1,0:T(1,128)}', space=vmem, size = 0x200, scoped, tag = 'scratch operand']
  %s0 = inlined_call_operand.vmem [shape: bf16[128,128], index: 0, kind: input, shape index: {}]
  %s1 = inlined_call_operand.vmem [shape: bf16[128,128], index: 1, kind: input, shape index: {}]
  %s2 = inlined_call_operand.vmem [shape: f32[1,128], index: 2, kind: input, shape index: {}]
  %s3 = inlined_call_operand.vmem [shape: f32[1,128], index: 3, kind: input, shape index: {}]
  %s4 = inlined_call_operand.vmem [shape: bf16[128,128], index: 4, kind: output, shape index: {}]
  %s5 = sld [smem:[#allocation0]]
  $region34: #{_lambda_.5} parent=0
    _
  %s7 = ssub.s32 1, %s5
  %s8 = scalar_select 0, %s7, %s5
  // Predicated region
  $region2: #{_lambda_.5} parent=0 // pred_check
    _
  $region3: #{_lambda_.5} parent=0 // pred_check_branch
    %10 = sbr.rel (0) target = $region5
  $region4: #{_lambda_.5} parent=0 // pred_region
    _
  $region5: #{_lambda_.5} parent=0 // pred_fallthru
    _
  // Predicated region
  $region6: #{_lambda_.5} parent=0 // pred_check
    _
  $region7: #{_lambda_.5} parent=0 // pred_check_branch
    %12 = sbr.rel (0) target = $region9
  $region8: #{_lambda_.5} parent=0 // pred_region
    _
  $region9: #{_lambda_.5} parent=0 // pred_fallthru
    _
  // Predicated region
  $region10: #{_lambda_.5} parent=0 // pred_check
    _
  $region11: #{_lambda_.5} parent=0 // pred_check_branch
    %14 = sbr.rel (0) target = $region13
  $region12: #{_lambda_.5} parent=0 // pred_region
    _
  $region13: #{_lambda_.5} parent=0 // pred_fallthru
    _
  // Predicated region
  $region14: #{_lambda_.5} parent=0 // pred_check
    _
  $region15: #{_lambda_.5} parent=0 // pred_check_branch
    %16 = sbr.rel (0) target = $region17
  $region16: #{_lambda_.5} parent=0 // pred_region
    _
  $region17: #{_lambda_.5} parent=0 // pred_fallthru
    _
  %v18 = vld [vmem:[%s0] sm:$0xf]
  %v19 = vld [vmem:[%s0 + $0x4] sm:$0xf]
  %v20 = vld [vmem:[%s0 + $0x8] sm:$0xf]
  %v21 = vld [vmem:[%s0 + $0xc] sm:$0xf]
  %v22 = vld [vmem:[%s0 + $0x10] sm:$0xf]
  %v23 = vld [vmem:[%s0 + $0x14] sm:$0xf]
  %v24 = vld [vmem:[%s0 + $0x18] sm:$0xf]
  %v25 = vld [vmem:[%s0 + $0x1c] sm:$0xf]
  %v26 = vld [vmem:[%s0 + $0x20] sm:$0xf]
  %v27 = vld [vmem:[%s0 + $0x24] sm:$0xf]
  %v28 = vld [vmem:[%s0 + $0x28] sm:$0xf]
  %v29 = vld [vmem:[%s0 + $0x2c] sm:$0xf]
  %v30 = vld [vmem:[%s0 + $0x30] sm:$0xf]
  %v31 = vld [vmem:[%s0 + $0x34] sm:$0xf]
  %v32 = vld [vmem:[%s0 + $0x38] sm:$0xf]
  %v33 = vld [vmem:[%s0 + $0x3c] sm:$0xf]
  %v34 = vld [vmem:[%s1] sm:$0xf]
  %v35 = vld [vmem:[%s1 + $0x4] sm:$0xf]
  %v36 = vld [vmem:[%s1 + $0x8] sm:$0xf]
  %v37 = vld [vmem:[%s1 + $0xc] sm:$0xf]
  %v38 = vld [vmem:[%s1 + $0x10] sm:$0xf]
  %v39 = vld [vmem:[%s1 + $0x14] sm:$0xf]
  %v40 = vld [vmem:[%s1 + $0x18] sm:$0xf]
  %v41 = vld [vmem:[%s1 + $0x1c] sm:$0xf]
  %v42 = vld [vmem:[%s1 + $0x20] sm:$0xf]
  %v43 = vld [vmem:[%s1 + $0x24] sm:$0xf]
  %v44 = vld [vmem:[%s1 + $0x28] sm:$0xf]
  %v45 = vld [vmem:[%s1 + $0x2c] sm:$0xf]
  %v46 = vld [vmem:[%s1 + $0x30] sm:$0xf]
  %v47 = vld [vmem:[%s1 + $0x34] sm:$0xf]
  %v48 = vld [vmem:[%s1 + $0x38] sm:$0xf]
  %v49 = vld [vmem:[%s1 + $0x3c] sm:$0xf]
  %v66 = vunpack.c.l.b16 %v18
  %v67 = vunpack.c.l.b16 %v19
  %v68 = vunpack.c.l.b16 %v20
  %v69 = vunpack.c.l.b16 %v21
  %v70 = vunpack.c.l.b16 %v22
  %v71 = vunpack.c.l.b16 %v23
  %v72 = vunpack.c.l.b16 %v24
  %v73 = vunpack.c.l.b16 %v25
  %v74 = vunpack.c.l.b16 %v26
  %v75 = vunpack.c.l.b16 %v27
  %v76 = vunpack.c.l.b16 %v28
  %v77 = vunpack.c.l.b16 %v29
  %v78 = vunpack.c.l.b16 %v30
  %v79 = vunpack.c.l.b16 %v31
  %v80 = vunpack.c.l.b16 %v32
  %v81 = vunpack.c.l.b16 %v33
  %v82 = vpack.c.b16 %v67, %v66
  %v83 = vpack.c.b16 %v69, %v68
  %v84 = vpack.c.b16 %v71, %v70
  %v85 = vpack.c.b16 %v73, %v72
  %v86 = vpack.c.b16 %v75, %v74
  %v87 = vpack.c.b16 %v77, %v76
  %v88 = vpack.c.b16 %v79, %v78
  %v89 = vpack.c.b16 %v81, %v80
  %v114 = vunpack.c.l.b16 %v34
  %v115 = vunpack.c.l.b16 %v35
  %v116 = vunpack.c.l.b16 %v36
  %v117 = vunpack.c.l.b16 %v37
  %v118 = vunpack.c.l.b16 %v38
  %v119 = vunpack.c.l.b16 %v39
  %v120 = vunpack.c.l.b16 %v40
  %v121 = vunpack.c.l.b16 %v41
  %v122 = vunpack.c.l.b16 %v42
  %v123 = vunpack.c.l.b16 %v43
  %v124 = vunpack.c.l.b16 %v44
  %v125 = vunpack.c.l.b16 %v45
  %v126 = vunpack.c.l.b16 %v46
  %v127 = vunpack.c.l.b16 %v47
  %v128 = vunpack.c.l.b16 %v48
  %v129 = vunpack.c.l.b16 %v49
  %v130 = vpack.c.b16 %v115, %v114
  %v131 = vpack.c.b16 %v117, %v116
  %v132 = vpack.c.b16 %v119, %v118
  %v133 = vpack.c.b16 %v121, %v120
  %v134 = vpack.c.b16 %v123, %v122
  %v135 = vpack.c.b16 %v125, %v124
  %v136 = vpack.c.b16 %v127, %v126
  %v137 = vpack.c.b16 %v129, %v128
  %146 = vmatprep.subr.bf16.mxu0 0
  %147 = vmatpush1.bf16.msra.mxu0 %v137
  %148 = vmatprep.subr.bf16.mxu0 0
  %149 = vmatpush1.bf16.msra.mxu0 %v136
  %150 = vmatprep.subr.bf16.mxu0 0
  %151 = vmatpush1.bf16.msra.mxu0 %v135
  %152 = vmatprep.subr.bf16.mxu0 0
  %153 = vmatpush1.bf16.msra.mxu0 %v134
  %154 = vmatprep.subr.bf16.mxu0 0
  %155 = vmatpush1.bf16.msra.mxu0 %v133
  %156 = vmatprep.subr.bf16.mxu0 0
  %157 = vmatpush1.bf16.msra.mxu0 %v132
  %158 = vmatprep.subr.bf16.mxu0 0
  %159 = vmatpush1.bf16.msra.mxu0 %v131
  %160 = vmatprep.subr.bf16.mxu0 0
  %161 = vmatpush1.bf16.msra.mxu0 %v130
  %162 = vmatprep.subr.bf16.mxu0 0
  %163 = vmatpush2.bf16.msra.mxu0 0
  %164 = vmatprep.subr.bf16.mxu0 0
  %165 = vmatpush2.bf16.msra.mxu0 0
  %166 = vmatprep.subr.bf16.mxu0 0
  %167 = vmatpush2.bf16.msra.mxu0 0
  %168 = vmatprep.subr.bf16.mxu0 0
  %169 = vmatpush2.bf16.msra.mxu0 0
  %170 = vmatprep.subr.bf16.mxu0 0
  %171 = vmatpush2.bf16.msra.mxu0 0
  %172 = vmatprep.subr.bf16.mxu0 0
  %173 = vmatpush2.bf16.msra.mxu0 0
  %174 = vmatprep.subr.bf16.mxu0 0
  %175 = vmatpush2.bf16.msra.mxu0 0
  %176 = vmatprep.subr.bf16.mxu0 0
  %177 = vmatpush2.bf16.msra.mxu0 0
  %178 = vmatprep.mubr.bf16.mxu0 0
  %179 = vmatmul.mubr.bf16.gmra.mxu0 %v82
  %v180 = vpop.f32.mrf.mxu0
  %v181 = vadd.f32 0.0, %v180
  %v182 = vpop.f32.mrf.mxu0
  %v183 = vpop.f32.mrf.mxu0
  %v184 = vadd.f32 0.0, %v183
  %v185 = vpop.f32.mrf.mxu0
  %186 = vmatprep.mubr.bf16.mxu0 0
  %187 = vmatmul.mubr.bf16.gmra.mxu0 %v83
  %v188 = vpop.f32.mrf.mxu0
  %v189 = vadd.f32 0.0, %v188
  %v190 = vpop.f32.mrf.mxu0
  %v191 = vpop.f32.mrf.mxu0
  %v192 = vadd.f32 0.0, %v191
  %v193 = vpop.f32.mrf.mxu0
  %194 = vmatprep.mubr.bf16.mxu0 0
  %195 = vmatmul.mubr.bf16.gmra.mxu0 %v84
  %v196 = vpop.f32.mrf.mxu0
  %v197 = vadd.f32 0.0, %v196
  %v198 = vpop.f32.mrf.mxu0
  %v199 = vpop.f32.mrf.mxu0
  %v200 = vadd.f32 0.0, %v199
  %v201 = vpop.f32.mrf.mxu0
  %202 = vmatprep.mubr.bf16.mxu0 0
  %203 = vmatmul.mubr.bf16.gmra.mxu0 %v85
  %v204 = vpop.f32.mrf.mxu0
  %v205 = vadd.f32 0.0, %v204
  %v206 = vpop.f32.mrf.mxu0
  %v207 = vpop.f32.mrf.mxu0
  %v208 = vadd.f32 0.0, %v207
  %v209 = vpop.f32.mrf.mxu0
  %210 = vmatprep.mubr.bf16.mxu0 0
  %211 = vmatmul.mubr.bf16.gmra.mxu0 %v86
  %v212 = vpop.f32.mrf.mxu0
  %v213 = vadd.f32 0.0, %v212
  %v214 = vpop.f32.mrf.mxu0
  %v215 = vpop.f32.mrf.mxu0
  %v216 = vadd.f32 0.0, %v215
  %v217 = vpop.f32.mrf.mxu0
  %218 = vmatprep.mubr.bf16.mxu0 0
  %219 = vmatmul.mubr.bf16.gmra.mxu0 %v87
  %v220 = vpop.f32.mrf.mxu0
  %v221 = vadd.f32 0.0, %v220
  %v222 = vpop.f32.mrf.mxu0
  %v223 = vpop.f32.mrf.mxu0
  %v224 = vadd.f32 0.0, %v223
  %v225 = vpop.f32.mrf.mxu0
  %226 = vmatprep.mubr.bf16.mxu0 0
  %227 = vmatmul.mubr.bf16.gmra.mxu0 %v88
  %v228 = vpop.f32.mrf.mxu0
  %v229 = vadd.f32 0.0, %v228
  %v230 = vpop.f32.mrf.mxu0
  %v231 = vpop.f32.mrf.mxu0
  %v232 = vadd.f32 0.0, %v231
  %v233 = vpop.f32.mrf.mxu0
  %234 = vmatprep.mubr.bf16.mxu0 0
  %235 = vmatmul.mubr.bf16.gmra.mxu0 %v89
  %v236 = vpop.f32.mrf.mxu0
  %v237 = vadd.f32 0.0, %v236
  %v238 = vpop.f32.mrf.mxu0
  %v239 = vpop.f32.mrf.mxu0
  %v240 = vadd.f32 0.0, %v239
  %v241 = vpop.f32.mrf.mxu0
  %242 = vdwg.mxu0
  %p243 = scmp.eq.s32.totalorder 0, 0
  // Predicated region
  $region18: #{_lambda_.5} parent=0 // pred_check
    %p244 = pneg %p243
  $region19: #{_lambda_.5} parent=0 // pred_check_branch
    %246 = sbr.rel (%p244) target = $region21
  $region20: #{_lambda_.5} parent=0 // pred_region
    %247 = vst [vmem:[#allocation2] sm:$0x1] 0.0
    %248 = vst [vmem:[#allocation3] sm:$0x1] 0.0
  $region21: #{_lambda_.5} parent=0 // pred_fallthru
    _
  %v249 = vld [vmem:[#allocation2] sm:$0x1]
  %v250 = vadd.f32 %v181, %v184
  %v251 = vadd.f32 %v250, %v189
  %v252 = vadd.f32 %v251, %v192
  %v253 = vadd.f32 %v252, %v197
  %v254 = vadd.f32 %v253, %v200
  %v255 = vadd.f32 %v254, %v205
  %v256 = vadd.f32 %v255, %v208
  %v257 = vadd.f32 %v256, %v213
  %v258 = vadd.f32 %v257, %v216
  %v259 = vadd.f32 %v258, %v221
  %v260 = vadd.f32 %v259, %v224
  %v261 = vadd.f32 %v260, %v229
  %v262 = vadd.f32 %v261, %v232
  %v263 = vadd.f32 %v262, %v237
  %v264 = vadd.f32 %v263, %v240
  %v265 = vrot.slane %v264, 4
  %v266 = vadd.f32 %v264, %v265
  %v267 = vrot.slane %v266, 2
  %v268 = vadd.f32 %v266, %v267
  %v269 = vrot.slane %v268, 1
  %v270 = vadd.f32 %v268, %v269
  %v271 = vadd.f32 %v249, %v270
  %272 = vst [vmem:[#allocation2] sm:$0x1] %v271
  %v273 = vld [vmem:[#allocation3] sm:$0x1]
  %v274 = vmul.f32 %v181, %v181
  %v275 = vmul.f32 %v184, %v184
  %v276 = vmul.f32 %v189, %v189
  %v277 = vmul.f32 %v192, %v192
  %v278 = vmul.f32 %v197, %v197
  %v279 = vmul.f32 %v200, %v200
  %v280 = vmul.f32 %v205, %v205
  %v281 = vmul.f32 %v208, %v208
  %v282 = vmul.f32 %v213, %v213
  %v283 = vmul.f32 %v216, %v216
  %v284 = vmul.f32 %v221, %v221
  %v285 = vmul.f32 %v224, %v224
  %v286 = vmul.f32 %v229, %v229
  %v287 = vmul.f32 %v232, %v232
  %v288 = vmul.f32 %v237, %v237
  %v289 = vmul.f32 %v240, %v240
  %v290 = vadd.f32 %v274, %v275
  %v291 = vadd.f32 %v290, %v276
  %v292 = vadd.f32 %v291, %v277
  %v293 = vadd.f32 %v292, %v278
  %v294 = vadd.f32 %v293, %v279
  %v295 = vadd.f32 %v294, %v280
  %v296 = vadd.f32 %v295, %v281
  %v297 = vadd.f32 %v296, %v282
  %v298 = vadd.f32 %v297, %v283
  %v299 = vadd.f32 %v298, %v284
  %v300 = vadd.f32 %v299, %v285
  %v301 = vadd.f32 %v300, %v286
  %v302 = vadd.f32 %v301, %v287
  %v303 = vadd.f32 %v302, %v288
  %v304 = vadd.f32 %v303, %v289
  %v305 = vrot.slane %v304, 4
  %v306 = vadd.f32 %v304, %v305
  %v307 = vrot.slane %v306, 2
  %v308 = vadd.f32 %v306, %v307
  %v309 = vrot.slane %v308, 1
  %v310 = vadd.f32 %v308, %v309
  %v311 = vadd.f32 %v273, %v310
  %312 = vst [vmem:[#allocation3] sm:$0x1] %v311
  %s313 = smul.u32 0, 128
  %v314 = vpack.c.bf16 %v184, %v181
  %v315 = vpack.c.bf16 %v192, %v189
  %v316 = vpack.c.bf16 %v200, %v197
  %v317 = vpack.c.bf16 %v208, %v205
  %v318 = vpack.c.bf16 %v216, %v213
  %v319 = vpack.c.bf16 %v224, %v221
  %v320 = vpack.c.bf16 %v232, %v229
  %v321 = vpack.c.bf16 %v240, %v237
  %v330 = vunpack.c.l.b16 %v314
  %v331 = vunpack.c.h.b16 %v314
  %v332 = vunpack.c.l.b16 %v315
  %v333 = vunpack.c.h.b16 %v315
  %v334 = vunpack.c.l.b16 %v316
  %v335 = vunpack.c.h.b16 %v316
  %v336 = vunpack.c.l.b16 %v317
  %v337 = vunpack.c.h.b16 %v317
  %v338 = vunpack.c.l.b16 %v318
  %v339 = vunpack.c.h.b16 %v318
  %v340 = vunpack.c.l.b16 %v319
  %v341 = vunpack.c.h.b16 %v319
  %v342 = vunpack.c.l.b16 %v320
  %v343 = vunpack.c.h.b16 %v320
  %v344 = vunpack.c.l.b16 %v321
  %v345 = vunpack.c.h.b16 %v321
  %v346 = vpack.c.b16 %v330, %v330
  %v347 = vpack.c.b16 %v331, %v331
  %v348 = vpack.c.b16 %v332, %v332
  %v349 = vpack.c.b16 %v333, %v333
  %v350 = vpack.c.b16 %v334, %v334
  %v351 = vpack.c.b16 %v335, %v335
  %v352 = vpack.c.b16 %v336, %v336
  %v353 = vpack.c.b16 %v337, %v337
  %v354 = vpack.c.b16 %v338, %v338
  %v355 = vpack.c.b16 %v339, %v339
  %v356 = vpack.c.b16 %v340, %v340
  %v357 = vpack.c.b16 %v341, %v341
  %v358 = vpack.c.b16 %v342, %v342
  %v359 = vpack.c.b16 %v343, %v343
  %v360 = vpack.c.b16 %v344, %v344
  %v361 = vpack.c.b16 %v345, %v345
  %s378 = sshra.s32 %s313, 3
  %s379 = sand.u32 %s313, 7
  %s380 = smul.addr %s378, 4
  %s381 = scalar_lea.vmem %s4, %s380
  %382 = vst [vmem:[%s381] sm:$0xf] %v346
  %383 = vst [vmem:[%s381 + $0x4] sm:$0xf] %v347
  %384 = vst [vmem:[%s381 + $0x8] sm:$0xf] %v348
  %385 = vst [vmem:[%s381 + $0xc] sm:$0xf] %v349
  %386 = vst [vmem:[%s381 + $0x10] sm:$0xf] %v350
  %387 = vst [vmem:[%s381 + $0x14] sm:$0xf] %v351
  %388 = vst [vmem:[%s381 + $0x18] sm:$0xf] %v352
  %389 = vst [vmem:[%s381 + $0x1c] sm:$0xf] %v353
  %390 = vst [vmem:[%s381 + $0x20] sm:$0xf] %v354
  %391 = vst [vmem:[%s381 + $0x24] sm:$0xf] %v355
  %392 = vst [vmem:[%s381 + $0x28] sm:$0xf] %v356
  %393 = vst [vmem:[%s381 + $0x2c] sm:$0xf] %v357
  %394 = vst [vmem:[%s381 + $0x30] sm:$0xf] %v358
  %395 = vst [vmem:[%s381 + $0x34] sm:$0xf] %v359
  %396 = vst [vmem:[%s381 + $0x38] sm:$0xf] %v360
  %397 = vst [vmem:[%s381 + $0x3c] sm:$0xf] %v361
  // Predicated region
  $region22: #{_lambda_.5} parent=0 // pred_check
    %p398 = pneg %p243
  $region23: #{_lambda_.5} parent=0 // pred_check_branch
    %400 = sbr.rel (%p398) target = $region25
  $region24: #{_lambda_.5} parent=0 // pred_region
    %v401 = vld [vmem:[#allocation2] sm:$0x1]
    %v402 = vmul.f32 %v401, 0.0078125
    %v403 = vld [vmem:[#allocation3] sm:$0x1]
    %v404 = vmul.f32 %v403, 0.0078125
    %v405 = vmul.f32 %v402, %v402
    %v406 = vsub.f32 %v404, %v405
    %v407 = vmax.f32 %v406, 0.0
    %v408 = vadd.f32 %v407, 1e-05
    %v409 = vrsqrt.pop %v408
    %v410 = vld [vmem:[%s2] sm:$0x1]
    %v411 = vmul.f32 %v410, %v409
    %v412 = vld [vmem:[%s3] sm:$0x1]
    %v413 = vmul.f32 %v402, %v411
    %v414 = vsub.f32 %v412, %v413
    %v415 = vld [vmem:[%s4] sm:$0xf]
    %v416 = vld [vmem:[%s4 + $0x4] sm:$0xf]
    %v417 = vld [vmem:[%s4 + $0x8] sm:$0xf]
    %v418 = vld [vmem:[%s4 + $0xc] sm:$0xf]
    %v419 = vld [vmem:[%s4 + $0x10] sm:$0xf]
    %v420 = vld [vmem:[%s4 + $0x14] sm:$0xf]
    %v421 = vld [vmem:[%s4 + $0x18] sm:$0xf]
    %v422 = vld [vmem:[%s4 + $0x1c] sm:$0xf]
    %v423 = vld [vmem:[%s4 + $0x20] sm:$0xf]
    %v424 = vld [vmem:[%s4 + $0x24] sm:$0xf]
    %v425 = vld [vmem:[%s4 + $0x28] sm:$0xf]
    %v426 = vld [vmem:[%s4 + $0x2c] sm:$0xf]
    %v427 = vld [vmem:[%s4 + $0x30] sm:$0xf]
    %v428 = vld [vmem:[%s4 + $0x34] sm:$0xf]
    %v429 = vld [vmem:[%s4 + $0x38] sm:$0xf]
    %v430 = vld [vmem:[%s4 + $0x3c] sm:$0xf]
    %v431 = vunpack.c.l.bf16 %v415
    %v432 = vunpack.c.l.bf16 %v416
    %v433 = vunpack.c.l.bf16 %v417
    %v434 = vunpack.c.l.bf16 %v418
    %v435 = vunpack.c.l.bf16 %v419
    %v436 = vunpack.c.l.bf16 %v420
    %v437 = vunpack.c.l.bf16 %v421
    %v438 = vunpack.c.l.bf16 %v422
    %v439 = vunpack.c.l.bf16 %v423
    %v440 = vunpack.c.l.bf16 %v424
    %v441 = vunpack.c.l.bf16 %v425
    %v442 = vunpack.c.l.bf16 %v426
    %v443 = vunpack.c.l.bf16 %v427
    %v444 = vunpack.c.l.bf16 %v428
    %v445 = vunpack.c.l.bf16 %v429
    %v446 = vunpack.c.l.bf16 %v430
    %v448 = vlaneseq
    %v449 = vshrl.u32 %v448, 7
    %v450 = vsub.s32 0, %v449
    %v451 = vrot.slane %v411, %v450
    %v453 = vmul.f32 %v431, %v451
    %v454 = vmul.f32 %v432, %v451
    %v455 = vmul.f32 %v433, %v451
    %v456 = vmul.f32 %v434, %v451
    %v457 = vmul.f32 %v435, %v451
    %v458 = vmul.f32 %v436, %v451
    %v459 = vmul.f32 %v437, %v451
    %v460 = vmul.f32 %v438, %v451
    %v461 = vmul.f32 %v439, %v451
    %v462 = vmul.f32 %v440, %v451
    %v463 = vmul.f32 %v441, %v451
    %v464 = vmul.f32 %v442, %v451
    %v465 = vmul.f32 %v443, %v451
    %v466 = vmul.f32 %v444, %v451
    %v467 = vmul.f32 %v445, %v451
    %v468 = vmul.f32 %v446, %v451
    %v470 = vlaneseq
    %v471 = vshrl.u32 %v470, 7
    %v472 = vsub.s32 0, %v471
    %v473 = vrot.slane %v414, %v472
    %v475 = vadd.f32 %v453, %v473
    %v476 = vadd.f32 %v454, %v473
    %v477 = vadd.f32 %v455, %v473
    %v478 = vadd.f32 %v456, %v473
    %v479 = vadd.f32 %v457, %v473
    %v480 = vadd.f32 %v458, %v473
    %v481 = vadd.f32 %v459, %v473
    %v482 = vadd.f32 %v460, %v473
    %v483 = vadd.f32 %v461, %v473
    %v484 = vadd.f32 %v462, %v473
    %v485 = vadd.f32 %v463, %v473
    %v486 = vadd.f32 %v464, %v473
    %v487 = vadd.f32 %v465, %v473
    %v488 = vadd.f32 %v466, %v473
    %v489 = vadd.f32 %v467, %v473
    %v490 = vadd.f32 %v468, %v473
    %v491 = vmax.f32 %v475, 0.0
    %v492 = vmax.f32 %v476, 0.0
    %v493 = vmax.f32 %v477, 0.0
    %v494 = vmax.f32 %v478, 0.0
    %v495 = vmax.f32 %v479, 0.0
    %v496 = vmax.f32 %v480, 0.0
    %v497 = vmax.f32 %v481, 0.0
    %v498 = vmax.f32 %v482, 0.0
    %v499 = vmax.f32 %v483, 0.0
    %v500 = vmax.f32 %v484, 0.0
    %v501 = vmax.f32 %v485, 0.0
    %v502 = vmax.f32 %v486, 0.0
    %v503 = vmax.f32 %v487, 0.0
    %v504 = vmax.f32 %v488, 0.0
    %v505 = vmax.f32 %v489, 0.0
    %v506 = vmax.f32 %v490, 0.0
    %v507 = vpack.c.bf16 %v492, %v491
    %v508 = vpack.c.bf16 %v494, %v493
    %v509 = vpack.c.bf16 %v496, %v495
    %v510 = vpack.c.bf16 %v498, %v497
    %v511 = vpack.c.bf16 %v500, %v499
    %v512 = vpack.c.bf16 %v502, %v501
    %v513 = vpack.c.bf16 %v504, %v503
    %v514 = vpack.c.bf16 %v506, %v505
    %v523 = vunpack.c.l.b16 %v507
    %v524 = vunpack.c.h.b16 %v507
    %v525 = vunpack.c.l.b16 %v508
    %v526 = vunpack.c.h.b16 %v508
    %v527 = vunpack.c.l.b16 %v509
    %v528 = vunpack.c.h.b16 %v509
    %v529 = vunpack.c.l.b16 %v510
    %v530 = vunpack.c.h.b16 %v510
    %v531 = vunpack.c.l.b16 %v511
    %v532 = vunpack.c.h.b16 %v511
    %v533 = vunpack.c.l.b16 %v512
    %v534 = vunpack.c.h.b16 %v512
    %v535 = vunpack.c.l.b16 %v513
    %v536 = vunpack.c.h.b16 %v513
    %v537 = vunpack.c.l.b16 %v514
    %v538 = vunpack.c.h.b16 %v514
    %v539 = vpack.c.b16 %v523, %v523
    %v540 = vpack.c.b16 %v524, %v524
    %v541 = vpack.c.b16 %v525, %v525
    %v542 = vpack.c.b16 %v526, %v526
    %v543 = vpack.c.b16 %v527, %v527
    %v544 = vpack.c.b16 %v528, %v528
    %v545 = vpack.c.b16 %v529, %v529
    %v546 = vpack.c.b16 %v530, %v530
    %v547 = vpack.c.b16 %v531, %v531
    %v548 = vpack.c.b16 %v532, %v532
    %v549 = vpack.c.b16 %v533, %v533
    %v550 = vpack.c.b16 %v534, %v534
    %v551 = vpack.c.b16 %v535, %v535
    %v552 = vpack.c.b16 %v536, %v536
    %v553 = vpack.c.b16 %v537, %v537
    %v554 = vpack.c.b16 %v538, %v538
    %571 = vst [vmem:[%s4] sm:$0xf] %v539
    %572 = vst [vmem:[%s4 + $0x4] sm:$0xf] %v540
    %573 = vst [vmem:[%s4 + $0x8] sm:$0xf] %v541
    %574 = vst [vmem:[%s4 + $0xc] sm:$0xf] %v542
    %575 = vst [vmem:[%s4 + $0x10] sm:$0xf] %v543
    %576 = vst [vmem:[%s4 + $0x14] sm:$0xf] %v544
    %577 = vst [vmem:[%s4 + $0x18] sm:$0xf] %v545
    %578 = vst [vmem:[%s4 + $0x1c] sm:$0xf] %v546
    %579 = vst [vmem:[%s4 + $0x20] sm:$0xf] %v547
    %580 = vst [vmem:[%s4 + $0x24] sm:$0xf] %v548
    %581 = vst [vmem:[%s4 + $0x28] sm:$0xf] %v549
    %582 = vst [vmem:[%s4 + $0x2c] sm:$0xf] %v550
    %583 = vst [vmem:[%s4 + $0x30] sm:$0xf] %v551
    %584 = vst [vmem:[%s4 + $0x34] sm:$0xf] %v552
    %585 = vst [vmem:[%s4 + $0x38] sm:$0xf] %v553
    %586 = vst [vmem:[%s4 + $0x3c] sm:$0xf] %v554
  $region25: #{_lambda_.5} parent=0 // pred_fallthru
    _
  // Predicated region
  $region26: #{_lambda_.5} parent=0 // pred_check
    _
  $region27: #{_lambda_.5} parent=0 // pred_check_branch
    %588 = sbr.rel (0) target = $region29
  $region28: #{_lambda_.5} parent=0 // pred_region
    _
  $region29: #{_lambda_.5} parent=0 // pred_fallthru
    _
  // Predicated region
  $region30: #{_lambda_.5} parent=0 // pred_check
    _
  $region31: #{_lambda_.5} parent=0 // pred_check_branch
    %590 = sbr.rel (0) target = $region33
  $region32: #{_lambda_.5} parent=0 // pred_region
    _
  $region33: #{_lambda_.5} parent=0 // pred_fallthru
    _

// kernel: _lambda_.7
$region0: #{_lambda_.7}
  #allocation0 [shape = 'u32[]', space=smem, size = 0x4, offset = 0x4, fixed_abs, tag = 'smem constant byte address 0x4 - core index']
  #allocation1 [shape = 'u32[144,128]{1,0:T(1,128)}', space=vmem, size = 0x12000, scoped, tag = 'internal scratch']
  #allocation2 [shape = 'f32[1,128]{1,0:T(1,128)}', space=vmem, size = 0x200, scoped, tag = 'scratch operand']
  #allocation3 [shape = 'f32[1,128]{1,0:T(1,128)}', space=vmem, size = 0x200, scoped, tag = 'scratch operand']
  %s0 = inlined_call_operand.vmem [shape: bf16[128,128], index: 0, kind: input, shape index: {}]
  %s1 = inlined_call_operand.vmem [shape: bf16[128,128], index: 1, kind: input, shape index: {}]
  %s2 = inlined_call_operand.vmem [shape: f32[1,128], index: 2, kind: input, shape index: {}]
  %s3 = inlined_call_operand.vmem [shape: f32[1,128], index: 3, kind: input, shape index: {}]
  %s4 = inlined_call_operand.vmem [shape: bf16[128,128], index: 4, kind: input, shape index: {}]
  %s5 = inlined_call_operand.vmem [shape: bf16[128,128], index: 5, kind: output, shape index: {}]
  %s6 = sld [smem:[#allocation0]]
  $region38: #{_lambda_.7} parent=0
    _
  %s8 = ssub.s32 1, %s6
  %s9 = scalar_select 0, %s8, %s6
  // Predicated region
  $region2: #{_lambda_.7} parent=0 // pred_check
    _
  $region3: #{_lambda_.7} parent=0 // pred_check_branch
    %11 = sbr.rel (0) target = $region5
  $region4: #{_lambda_.7} parent=0 // pred_region
    _
  $region5: #{_lambda_.7} parent=0 // pred_fallthru
    _
  // Predicated region
  $region6: #{_lambda_.7} parent=0 // pred_check
    _
  $region7: #{_lambda_.7} parent=0 // pred_check_branch
    %13 = sbr.rel (0) target = $region9
  $region8: #{_lambda_.7} parent=0 // pred_region
    _
  $region9: #{_lambda_.7} parent=0 // pred_fallthru
    _
  // Predicated region
  $region10: #{_lambda_.7} parent=0 // pred_check
    _
  $region11: #{_lambda_.7} parent=0 // pred_check_branch
    %15 = sbr.rel (0) target = $region13
  $region12: #{_lambda_.7} parent=0 // pred_region
    _
  $region13: #{_lambda_.7} parent=0 // pred_fallthru
    _
  // Predicated region
  $region14: #{_lambda_.7} parent=0 // pred_check
    _
  $region15: #{_lambda_.7} parent=0 // pred_check_branch
    %17 = sbr.rel (0) target = $region17
  $region16: #{_lambda_.7} parent=0 // pred_region
    _
  $region17: #{_lambda_.7} parent=0 // pred_fallthru
    _
  // Predicated region
  $region18: #{_lambda_.7} parent=0 // pred_check
    _
  $region19: #{_lambda_.7} parent=0 // pred_check_branch
    %19 = sbr.rel (0) target = $region21
  $region20: #{_lambda_.7} parent=0 // pred_region
    _
  $region21: #{_lambda_.7} parent=0 // pred_fallthru
    _
  %v21 = vld [vmem:[%s0] sm:$0xf]
  %v22 = vld [vmem:[%s0 + $0x4] sm:$0xf]
  %v23 = vld [vmem:[%s0 + $0x8] sm:$0xf]
  %v24 = vld [vmem:[%s0 + $0xc] sm:$0xf]
  %v25 = vld [vmem:[%s0 + $0x10] sm:$0xf]
  %v26 = vld [vmem:[%s0 + $0x14] sm:$0xf]
  %v27 = vld [vmem:[%s0 + $0x18] sm:$0xf]
  %v28 = vld [vmem:[%s0 + $0x1c] sm:$0xf]
  %v29 = vld [vmem:[%s0 + $0x20] sm:$0xf]
  %v30 = vld [vmem:[%s0 + $0x24] sm:$0xf]
  %v31 = vld [vmem:[%s0 + $0x28] sm:$0xf]
  %v32 = vld [vmem:[%s0 + $0x2c] sm:$0xf]
  %v33 = vld [vmem:[%s0 + $0x30] sm:$0xf]
  %v34 = vld [vmem:[%s0 + $0x34] sm:$0xf]
  %v35 = vld [vmem:[%s0 + $0x38] sm:$0xf]
  %v36 = vld [vmem:[%s0 + $0x3c] sm:$0xf]
  %v37 = vld [vmem:[%s1] sm:$0xf]
  %v38 = vld [vmem:[%s1 + $0x4] sm:$0xf]
  %v39 = vld [vmem:[%s1 + $0x8] sm:$0xf]
  %v40 = vld [vmem:[%s1 + $0xc] sm:$0xf]
  %v41 = vld [vmem:[%s1 + $0x10] sm:$0xf]
  %v42 = vld [vmem:[%s1 + $0x14] sm:$0xf]
  %v43 = vld [vmem:[%s1 + $0x18] sm:$0xf]
  %v44 = vld [vmem:[%s1 + $0x1c] sm:$0xf]
  %v45 = vld [vmem:[%s1 + $0x20] sm:$0xf]
  %v46 = vld [vmem:[%s1 + $0x24] sm:$0xf]
  %v47 = vld [vmem:[%s1 + $0x28] sm:$0xf]
  %v48 = vld [vmem:[%s1 + $0x2c] sm:$0xf]
  %v49 = vld [vmem:[%s1 + $0x30] sm:$0xf]
  %v50 = vld [vmem:[%s1 + $0x34] sm:$0xf]
  %v51 = vld [vmem:[%s1 + $0x38] sm:$0xf]
  %v52 = vld [vmem:[%s1 + $0x3c] sm:$0xf]
  %v69 = vunpack.c.l.b16 %v21
  %v70 = vunpack.c.l.b16 %v22
  %v71 = vunpack.c.l.b16 %v23
  %v72 = vunpack.c.l.b16 %v24
  %v73 = vunpack.c.l.b16 %v25
  %v74 = vunpack.c.l.b16 %v26
  %v75 = vunpack.c.l.b16 %v27
  %v76 = vunpack.c.l.b16 %v28
  %v77 = vunpack.c.l.b16 %v29
  %v78 = vunpack.c.l.b16 %v30
  %v79 = vunpack.c.l.b16 %v31
  %v80 = vunpack.c.l.b16 %v32
  %v81 = vunpack.c.l.b16 %v33
  %v82 = vunpack.c.l.b16 %v34
  %v83 = vunpack.c.l.b16 %v35
  %v84 = vunpack.c.l.b16 %v36
  %v85 = vpack.c.b16 %v70, %v69
  %v86 = vpack.c.b16 %v72, %v71
  %v87 = vpack.c.b16 %v74, %v73
  %v88 = vpack.c.b16 %v76, %v75
  %v89 = vpack.c.b16 %v78, %v77
  %v90 = vpack.c.b16 %v80, %v79
  %v91 = vpack.c.b16 %v82, %v81
  %v92 = vpack.c.b16 %v84, %v83
  %v117 = vunpack.c.l.b16 %v37
  %v118 = vunpack.c.l.b16 %v38
  %v119 = vunpack.c.l.b16 %v39
  %v120 = vunpack.c.l.b16 %v40
  %v121 = vunpack.c.l.b16 %v41
  %v122 = vunpack.c.l.b16 %v42
  %v123 = vunpack.c.l.b16 %v43
  %v124 = vunpack.c.l.b16 %v44
  %v125 = vunpack.c.l.b16 %v45
  %v126 = vunpack.c.l.b16 %v46
  %v127 = vunpack.c.l.b16 %v47
  %v128 = vunpack.c.l.b16 %v48
  %v129 = vunpack.c.l.b16 %v49
  %v130 = vunpack.c.l.b16 %v50
  %v131 = vunpack.c.l.b16 %v51
  %v132 = vunpack.c.l.b16 %v52
  %v133 = vpack.c.b16 %v118, %v117
  %v134 = vpack.c.b16 %v120, %v119
  %v135 = vpack.c.b16 %v122, %v121
  %v136 = vpack.c.b16 %v124, %v123
  %v137 = vpack.c.b16 %v126, %v125
  %v138 = vpack.c.b16 %v128, %v127
  %v139 = vpack.c.b16 %v130, %v129
  %v140 = vpack.c.b16 %v132, %v131
  %149 = vmatprep.subr.bf16.mxu0 0
  %150 = vmatpush1.bf16.msra.mxu0 %v140
  %151 = vmatprep.subr.bf16.mxu0 0
  %152 = vmatpush1.bf16.msra.mxu0 %v139
  %153 = vmatprep.subr.bf16.mxu0 0
  %154 = vmatpush1.bf16.msra.mxu0 %v138
  %155 = vmatprep.subr.bf16.mxu0 0
  %156 = vmatpush1.bf16.msra.mxu0 %v137
  %157 = vmatprep.subr.bf16.mxu0 0
  %158 = vmatpush1.bf16.msra.mxu0 %v136
  %159 = vmatprep.subr.bf16.mxu0 0
  %160 = vmatpush1.bf16.msra.mxu0 %v135
  %161 = vmatprep.subr.bf16.mxu0 0
  %162 = vmatpush1.bf16.msra.mxu0 %v134
  %163 = vmatprep.subr.bf16.mxu0 0
  %164 = vmatpush1.bf16.msra.mxu0 %v133
  %165 = vmatprep.subr.bf16.mxu0 0
  %166 = vmatpush2.bf16.msra.mxu0 0
  %167 = vmatprep.subr.bf16.mxu0 0
  %168 = vmatpush2.bf16.msra.mxu0 0
  %169 = vmatprep.subr.bf16.mxu0 0
  %170 = vmatpush2.bf16.msra.mxu0 0
  %171 = vmatprep.subr.bf16.mxu0 0
  %172 = vmatpush2.bf16.msra.mxu0 0
  %173 = vmatprep.subr.bf16.mxu0 0
  %174 = vmatpush2.bf16.msra.mxu0 0
  %175 = vmatprep.subr.bf16.mxu0 0
  %176 = vmatpush2.bf16.msra.mxu0 0
  %177 = vmatprep.subr.bf16.mxu0 0
  %178 = vmatpush2.bf16.msra.mxu0 0
  %179 = vmatprep.subr.bf16.mxu0 0
  %180 = vmatpush2.bf16.msra.mxu0 0
  %181 = vmatprep.mubr.bf16.mxu0 0
  %182 = vmatmul.mubr.bf16.gmra.mxu0 %v85
  %v183 = vpop.f32.mrf.mxu0
  %v184 = vadd.f32 0.0, %v183
  %v185 = vpop.f32.mrf.mxu0
  %v186 = vpop.f32.mrf.mxu0
  %v187 = vadd.f32 0.0, %v186
  %v188 = vpop.f32.mrf.mxu0
  %189 = vmatprep.mubr.bf16.mxu0 0
  %190 = vmatmul.mubr.bf16.gmra.mxu0 %v86
  %v191 = vpop.f32.mrf.mxu0
  %v192 = vadd.f32 0.0, %v191
  %v193 = vpop.f32.mrf.mxu0
  %v194 = vpop.f32.mrf.mxu0
  %v195 = vadd.f32 0.0, %v194
  %v196 = vpop.f32.mrf.mxu0
  %197 = vmatprep.mubr.bf16.mxu0 0
  %198 = vmatmul.mubr.bf16.gmra.mxu0 %v87
  %v199 = vpop.f32.mrf.mxu0
  %v200 = vadd.f32 0.0, %v199
  %v201 = vpop.f32.mrf.mxu0
  %v202 = vpop.f32.mrf.mxu0
  %v203 = vadd.f32 0.0, %v202
  %v204 = vpop.f32.mrf.mxu0
  %205 = vmatprep.mubr.bf16.mxu0 0
  %206 = vmatmul.mubr.bf16.gmra.mxu0 %v88
  %v207 = vpop.f32.mrf.mxu0
  %v208 = vadd.f32 0.0, %v207
  %v209 = vpop.f32.mrf.mxu0
  %v210 = vpop.f32.mrf.mxu0
  %v211 = vadd.f32 0.0, %v210
  %v212 = vpop.f32.mrf.mxu0
  %213 = vmatprep.mubr.bf16.mxu0 0
  %214 = vmatmul.mubr.bf16.gmra.mxu0 %v89
  %v215 = vpop.f32.mrf.mxu0
  %v216 = vadd.f32 0.0, %v215
  %v217 = vpop.f32.mrf.mxu0
  %v218 = vpop.f32.mrf.mxu0
  %v219 = vadd.f32 0.0, %v218
  %v220 = vpop.f32.mrf.mxu0
  %221 = vmatprep.mubr.bf16.mxu0 0
  %222 = vmatmul.mubr.bf16.gmra.mxu0 %v90
  %v223 = vpop.f32.mrf.mxu0
  %v224 = vadd.f32 0.0, %v223
  %v225 = vpop.f32.mrf.mxu0
  %v226 = vpop.f32.mrf.mxu0
  %v227 = vadd.f32 0.0, %v226
  %v228 = vpop.f32.mrf.mxu0
  %229 = vmatprep.mubr.bf16.mxu0 0
  %230 = vmatmul.mubr.bf16.gmra.mxu0 %v91
  %v231 = vpop.f32.mrf.mxu0
  %v232 = vadd.f32 0.0, %v231
  %v233 = vpop.f32.mrf.mxu0
  %v234 = vpop.f32.mrf.mxu0
  %v235 = vadd.f32 0.0, %v234
  %v236 = vpop.f32.mrf.mxu0
  %237 = vmatprep.mubr.bf16.mxu0 0
  %238 = vmatmul.mubr.bf16.gmra.mxu0 %v92
  %v239 = vpop.f32.mrf.mxu0
  %v240 = vadd.f32 0.0, %v239
  %v241 = vpop.f32.mrf.mxu0
  %v242 = vpop.f32.mrf.mxu0
  %v243 = vadd.f32 0.0, %v242
  %v244 = vpop.f32.mrf.mxu0
  %245 = vdwg.mxu0
  %p246 = scmp.eq.s32.totalorder 0, 0
  // Predicated region
  $region22: #{_lambda_.7} parent=0 // pred_check
    %p247 = pneg %p246
  $region23: #{_lambda_.7} parent=0 // pred_check_branch
    %249 = sbr.rel (%p247) target = $region25
  $region24: #{_lambda_.7} parent=0 // pred_region
    %250 = vst [vmem:[#allocation2] sm:$0x1] 0.0
    %251 = vst [vmem:[#allocation3] sm:$0x1] 0.0
  $region25: #{_lambda_.7} parent=0 // pred_fallthru
    _
  %v252 = vld [vmem:[#allocation2] sm:$0x1]
  %v253 = vadd.f32 %v184, %v187
  %v254 = vadd.f32 %v253, %v192
  %v255 = vadd.f32 %v254, %v195
  %v256 = vadd.f32 %v255, %v200
  %v257 = vadd.f32 %v256, %v203
  %v258 = vadd.f32 %v257, %v208
  %v259 = vadd.f32 %v258, %v211
  %v260 = vadd.f32 %v259, %v216
  %v261 = vadd.f32 %v260, %v219
  %v262 = vadd.f32 %v261, %v224
  %v263 = vadd.f32 %v262, %v227
  %v264 = vadd.f32 %v263, %v232
  %v265 = vadd.f32 %v264, %v235
  %v266 = vadd.f32 %v265, %v240
  %v267 = vadd.f32 %v266, %v243
  %v268 = vrot.slane %v267, 4
  %v269 = vadd.f32 %v267, %v268
  %v270 = vrot.slane %v269, 2
  %v271 = vadd.f32 %v269, %v270
  %v272 = vrot.slane %v271, 1
  %v273 = vadd.f32 %v271, %v272
  %v274 = vadd.f32 %v252, %v273
  %275 = vst [vmem:[#allocation2] sm:$0x1] %v274
  %v276 = vld [vmem:[#allocation3] sm:$0x1]
  %v277 = vmul.f32 %v184, %v184
  %v278 = vmul.f32 %v187, %v187
  %v279 = vmul.f32 %v192, %v192
  %v280 = vmul.f32 %v195, %v195
  %v281 = vmul.f32 %v200, %v200
  %v282 = vmul.f32 %v203, %v203
  %v283 = vmul.f32 %v208, %v208
  %v284 = vmul.f32 %v211, %v211
  %v285 = vmul.f32 %v216, %v216
  %v286 = vmul.f32 %v219, %v219
  %v287 = vmul.f32 %v224, %v224
  %v288 = vmul.f32 %v227, %v227
  %v289 = vmul.f32 %v232, %v232
  %v290 = vmul.f32 %v235, %v235
  %v291 = vmul.f32 %v240, %v240
  %v292 = vmul.f32 %v243, %v243
  %v293 = vadd.f32 %v277, %v278
  %v294 = vadd.f32 %v293, %v279
  %v295 = vadd.f32 %v294, %v280
  %v296 = vadd.f32 %v295, %v281
  %v297 = vadd.f32 %v296, %v282
  %v298 = vadd.f32 %v297, %v283
  %v299 = vadd.f32 %v298, %v284
  %v300 = vadd.f32 %v299, %v285
  %v301 = vadd.f32 %v300, %v286
  %v302 = vadd.f32 %v301, %v287
  %v303 = vadd.f32 %v302, %v288
  %v304 = vadd.f32 %v303, %v289
  %v305 = vadd.f32 %v304, %v290
  %v306 = vadd.f32 %v305, %v291
  %v307 = vadd.f32 %v306, %v292
  %v308 = vrot.slane %v307, 4
  %v309 = vadd.f32 %v307, %v308
  %v310 = vrot.slane %v309, 2
  %v311 = vadd.f32 %v309, %v310
  %v312 = vrot.slane %v311, 1
  %v313 = vadd.f32 %v311, %v312
  %v314 = vadd.f32 %v276, %v313
  %315 = vst [vmem:[#allocation3] sm:$0x1] %v314
  %s316 = smul.u32 0, 128
  %v317 = vpack.c.bf16 %v187, %v184
  %v318 = vpack.c.bf16 %v195, %v192
  %v319 = vpack.c.bf16 %v203, %v200
  %v320 = vpack.c.bf16 %v211, %v208
  %v321 = vpack.c.bf16 %v219, %v216
  %v322 = vpack.c.bf16 %v227, %v224
  %v323 = vpack.c.bf16 %v235, %v232
  %v324 = vpack.c.bf16 %v243, %v240
  %v333 = vunpack.c.l.b16 %v317
  %v334 = vunpack.c.h.b16 %v317
  %v335 = vunpack.c.l.b16 %v318
  %v336 = vunpack.c.h.b16 %v318
  %v337 = vunpack.c.l.b16 %v319
  %v338 = vunpack.c.h.b16 %v319
  %v339 = vunpack.c.l.b16 %v320
  %v340 = vunpack.c.h.b16 %v320
  %v341 = vunpack.c.l.b16 %v321
  %v342 = vunpack.c.h.b16 %v321
  %v343 = vunpack.c.l.b16 %v322
  %v344 = vunpack.c.h.b16 %v322
  %v345 = vunpack.c.l.b16 %v323
  %v346 = vunpack.c.h.b16 %v323
  %v347 = vunpack.c.l.b16 %v324
  %v348 = vunpack.c.h.b16 %v324
  %v349 = vpack.c.b16 %v333, %v333
  %v350 = vpack.c.b16 %v334, %v334
  %v351 = vpack.c.b16 %v335, %v335
  %v352 = vpack.c.b16 %v336, %v336
  %v353 = vpack.c.b16 %v337, %v337
  %v354 = vpack.c.b16 %v338, %v338
  %v355 = vpack.c.b16 %v339, %v339
  %v356 = vpack.c.b16 %v340, %v340
  %v357 = vpack.c.b16 %v341, %v341
  %v358 = vpack.c.b16 %v342, %v342
  %v359 = vpack.c.b16 %v343, %v343
  %v360 = vpack.c.b16 %v344, %v344
  %v361 = vpack.c.b16 %v345, %v345
  %v362 = vpack.c.b16 %v346, %v346
  %v363 = vpack.c.b16 %v347, %v347
  %v364 = vpack.c.b16 %v348, %v348
  %s381 = sshra.s32 %s316, 3
  %s382 = sand.u32 %s316, 7
  %s383 = smul.addr %s381, 4
  %s384 = scalar_lea.vmem %s5, %s383
  %385 = vst [vmem:[%s384] sm:$0xf] %v349
  %386 = vst [vmem:[%s384 + $0x4] sm:$0xf] %v350
  %387 = vst [vmem:[%s384 + $0x8] sm:$0xf] %v351
  %388 = vst [vmem:[%s384 + $0xc] sm:$0xf] %v352
  %389 = vst [vmem:[%s384 + $0x10] sm:$0xf] %v353
  %390 = vst [vmem:[%s384 + $0x14] sm:$0xf] %v354
  %391 = vst [vmem:[%s384 + $0x18] sm:$0xf] %v355
  %392 = vst [vmem:[%s384 + $0x1c] sm:$0xf] %v356
  %393 = vst [vmem:[%s384 + $0x20] sm:$0xf] %v357
  %394 = vst [vmem:[%s384 + $0x24] sm:$0xf] %v358
  %395 = vst [vmem:[%s384 + $0x28] sm:$0xf] %v359
  %396 = vst [vmem:[%s384 + $0x2c] sm:$0xf] %v360
  %397 = vst [vmem:[%s384 + $0x30] sm:$0xf] %v361
  %398 = vst [vmem:[%s384 + $0x34] sm:$0xf] %v362
  %399 = vst [vmem:[%s384 + $0x38] sm:$0xf] %v363
  %400 = vst [vmem:[%s384 + $0x3c] sm:$0xf] %v364
  // Predicated region
  $region26: #{_lambda_.7} parent=0 // pred_check
    %p401 = pneg %p246
  $region27: #{_lambda_.7} parent=0 // pred_check_branch
    %403 = sbr.rel (%p401) target = $region29
  $region28: #{_lambda_.7} parent=0 // pred_region
    %v404 = vld [vmem:[#allocation2] sm:$0x1]
    %v405 = vmul.f32 %v404, 0.0078125
    %v406 = vld [vmem:[#allocation3] sm:$0x1]
    %v407 = vmul.f32 %v406, 0.0078125
    %v408 = vmul.f32 %v405, %v405
    %v409 = vsub.f32 %v407, %v408
    %v410 = vmax.f32 %v409, 0.0
    %v411 = vadd.f32 %v410, 1e-05
    %v412 = vrsqrt.pop %v411
    %v413 = vld [vmem:[%s2] sm:$0x1]
    %v414 = vmul.f32 %v413, %v412
    %v415 = vld [vmem:[%s3] sm:$0x1]
    %v416 = vmul.f32 %v405, %v414
    %v417 = vsub.f32 %v415, %v416
    %v418 = vld [vmem:[%s5] sm:$0xf]
    %v419 = vld [vmem:[%s5 + $0x4] sm:$0xf]
    %v420 = vld [vmem:[%s5 + $0x8] sm:$0xf]
    %v421 = vld [vmem:[%s5 + $0xc] sm:$0xf]
    %v422 = vld [vmem:[%s5 + $0x10] sm:$0xf]
    %v423 = vld [vmem:[%s5 + $0x14] sm:$0xf]
    %v424 = vld [vmem:[%s5 + $0x18] sm:$0xf]
    %v425 = vld [vmem:[%s5 + $0x1c] sm:$0xf]
    %v426 = vld [vmem:[%s5 + $0x20] sm:$0xf]
    %v427 = vld [vmem:[%s5 + $0x24] sm:$0xf]
    %v428 = vld [vmem:[%s5 + $0x28] sm:$0xf]
    %v429 = vld [vmem:[%s5 + $0x2c] sm:$0xf]
    %v430 = vld [vmem:[%s5 + $0x30] sm:$0xf]
    %v431 = vld [vmem:[%s5 + $0x34] sm:$0xf]
    %v432 = vld [vmem:[%s5 + $0x38] sm:$0xf]
    %v433 = vld [vmem:[%s5 + $0x3c] sm:$0xf]
    %v434 = vunpack.c.l.bf16 %v418
    %v435 = vunpack.c.l.bf16 %v419
    %v436 = vunpack.c.l.bf16 %v420
    %v437 = vunpack.c.l.bf16 %v421
    %v438 = vunpack.c.l.bf16 %v422
    %v439 = vunpack.c.l.bf16 %v423
    %v440 = vunpack.c.l.bf16 %v424
    %v441 = vunpack.c.l.bf16 %v425
    %v442 = vunpack.c.l.bf16 %v426
    %v443 = vunpack.c.l.bf16 %v427
    %v444 = vunpack.c.l.bf16 %v428
    %v445 = vunpack.c.l.bf16 %v429
    %v446 = vunpack.c.l.bf16 %v430
    %v447 = vunpack.c.l.bf16 %v431
    %v448 = vunpack.c.l.bf16 %v432
    %v449 = vunpack.c.l.bf16 %v433
    %v451 = vlaneseq
    %v452 = vshrl.u32 %v451, 7
    %v453 = vsub.s32 0, %v452
    %v454 = vrot.slane %v414, %v453
    %v456 = vmul.f32 %v434, %v454
    %v457 = vmul.f32 %v435, %v454
    %v458 = vmul.f32 %v436, %v454
    %v459 = vmul.f32 %v437, %v454
    %v460 = vmul.f32 %v438, %v454
    %v461 = vmul.f32 %v439, %v454
    %v462 = vmul.f32 %v440, %v454
    %v463 = vmul.f32 %v441, %v454
    %v464 = vmul.f32 %v442, %v454
    %v465 = vmul.f32 %v443, %v454
    %v466 = vmul.f32 %v444, %v454
    %v467 = vmul.f32 %v445, %v454
    %v468 = vmul.f32 %v446, %v454
    %v469 = vmul.f32 %v447, %v454
    %v470 = vmul.f32 %v448, %v454
    %v471 = vmul.f32 %v449, %v454
    %v473 = vlaneseq
    %v474 = vshrl.u32 %v473, 7
    %v475 = vsub.s32 0, %v474
    %v476 = vrot.slane %v417, %v475
    %v478 = vadd.f32 %v456, %v476
    %v479 = vadd.f32 %v457, %v476
    %v480 = vadd.f32 %v458, %v476
    %v481 = vadd.f32 %v459, %v476
    %v482 = vadd.f32 %v460, %v476
    %v483 = vadd.f32 %v461, %v476
    %v484 = vadd.f32 %v462, %v476
    %v485 = vadd.f32 %v463, %v476
    %v486 = vadd.f32 %v464, %v476
    %v487 = vadd.f32 %v465, %v476
    %v488 = vadd.f32 %v466, %v476
    %v489 = vadd.f32 %v467, %v476
    %v490 = vadd.f32 %v468, %v476
    %v491 = vadd.f32 %v469, %v476
    %v492 = vadd.f32 %v470, %v476
    %v493 = vadd.f32 %v471, %v476
    %v494 = vld [vmem:[%s4] sm:$0xf]
    %v495 = vld [vmem:[%s4 + $0x4] sm:$0xf]
    %v496 = vld [vmem:[%s4 + $0x8] sm:$0xf]
    %v497 = vld [vmem:[%s4 + $0xc] sm:$0xf]
    %v498 = vld [vmem:[%s4 + $0x10] sm:$0xf]
    %v499 = vld [vmem:[%s4 + $0x14] sm:$0xf]
    %v500 = vld [vmem:[%s4 + $0x18] sm:$0xf]
    %v501 = vld [vmem:[%s4 + $0x1c] sm:$0xf]
    %v502 = vld [vmem:[%s4 + $0x20] sm:$0xf]
    %v503 = vld [vmem:[%s4 + $0x24] sm:$0xf]
    %v504 = vld [vmem:[%s4 + $0x28] sm:$0xf]
    %v505 = vld [vmem:[%s4 + $0x2c] sm:$0xf]
    %v506 = vld [vmem:[%s4 + $0x30] sm:$0xf]
    %v507 = vld [vmem:[%s4 + $0x34] sm:$0xf]
    %v508 = vld [vmem:[%s4 + $0x38] sm:$0xf]
    %v509 = vld [vmem:[%s4 + $0x3c] sm:$0xf]
    %v510 = vunpack.c.l.bf16 %v494
    %v511 = vunpack.c.l.bf16 %v495
    %v512 = vunpack.c.l.bf16 %v496
    %v513 = vunpack.c.l.bf16 %v497
    %v514 = vunpack.c.l.bf16 %v498
    %v515 = vunpack.c.l.bf16 %v499
    %v516 = vunpack.c.l.bf16 %v500
    %v517 = vunpack.c.l.bf16 %v501
    %v518 = vunpack.c.l.bf16 %v502
    %v519 = vunpack.c.l.bf16 %v503
    %v520 = vunpack.c.l.bf16 %v504
    %v521 = vunpack.c.l.bf16 %v505
    %v522 = vunpack.c.l.bf16 %v506
    %v523 = vunpack.c.l.bf16 %v507
    %v524 = vunpack.c.l.bf16 %v508
    %v525 = vunpack.c.l.bf16 %v509
    %v526 = vadd.f32 %v478, %v510
    %v527 = vadd.f32 %v479, %v511
    %v528 = vadd.f32 %v480, %v512
    %v529 = vadd.f32 %v481, %v513
    %v530 = vadd.f32 %v482, %v514
    %v531 = vadd.f32 %v483, %v515
    %v532 = vadd.f32 %v484, %v516
    %v533 = vadd.f32 %v485, %v517
    %v534 = vadd.f32 %v486, %v518
    %v535 = vadd.f32 %v487, %v519
    %v536 = vadd.f32 %v488, %v520
    %v537 = vadd.f32 %v489, %v521
    %v538 = vadd.f32 %v490, %v522
    %v539 = vadd.f32 %v491, %v523
    %v540 = vadd.f32 %v492, %v524
    %v541 = vadd.f32 %v493, %v525
    %v542 = vmax.f32 %v526, 0.0
    %v543 = vmax.f32 %v527, 0.0
    %v544 = vmax.f32 %v528, 0.0
    %v545 = vmax.f32 %v529, 0.0
    %v546 = vmax.f32 %v530, 0.0
    %v547 = vmax.f32 %v531, 0.0
    %v548 = vmax.f32 %v532, 0.0
    %v549 = vmax.f32 %v533, 0.0
    %v550 = vmax.f32 %v534, 0.0
    %v551 = vmax.f32 %v535, 0.0
    %v552 = vmax.f32 %v536, 0.0
    %v553 = vmax.f32 %v537, 0.0
    %v554 = vmax.f32 %v538, 0.0
    %v555 = vmax.f32 %v539, 0.0
    %v556 = vmax.f32 %v540, 0.0
    %v557 = vmax.f32 %v541, 0.0
    %v558 = vpack.c.bf16 %v543, %v542
    %v559 = vpack.c.bf16 %v545, %v544
    %v560 = vpack.c.bf16 %v547, %v546
    %v561 = vpack.c.bf16 %v549, %v548
    %v562 = vpack.c.bf16 %v551, %v550
    %v563 = vpack.c.bf16 %v553, %v552
    %v564 = vpack.c.bf16 %v555, %v554
    %v565 = vpack.c.bf16 %v557, %v556
    %v574 = vunpack.c.l.b16 %v558
    %v575 = vunpack.c.h.b16 %v558
    %v576 = vunpack.c.l.b16 %v559
    %v577 = vunpack.c.h.b16 %v559
    %v578 = vunpack.c.l.b16 %v560
    %v579 = vunpack.c.h.b16 %v560
    %v580 = vunpack.c.l.b16 %v561
    %v581 = vunpack.c.h.b16 %v561
    %v582 = vunpack.c.l.b16 %v562
    %v583 = vunpack.c.h.b16 %v562
    %v584 = vunpack.c.l.b16 %v563
    %v585 = vunpack.c.h.b16 %v563
    %v586 = vunpack.c.l.b16 %v564
    %v587 = vunpack.c.h.b16 %v564
    %v588 = vunpack.c.l.b16 %v565
    %v589 = vunpack.c.h.b16 %v565
    %v590 = vpack.c.b16 %v574, %v574
    %v591 = vpack.c.b16 %v575, %v575
    %v592 = vpack.c.b16 %v576, %v576
    %v593 = vpack.c.b16 %v577, %v577
    %v594 = vpack.c.b16 %v578, %v578
    %v595 = vpack.c.b16 %v579, %v579
    %v596 = vpack.c.b16 %v580, %v580
    %v597 = vpack.c.b16 %v581, %v581
    %v598 = vpack.c.b16 %v582, %v582
    %v599 = vpack.c.b16 %v583, %v583
    %v600 = vpack.c.b16 %v584, %v584
    %v601 = vpack.c.b16 %v585, %v585
    %v602 = vpack.c.b16 %v586, %v586
    %v603 = vpack.c.b16 %v587, %v587
    %v604 = vpack.c.b16 %v588, %v588
    %v605 = vpack.c.b16 %v589, %v589
    %622 = vst [vmem:[%s5] sm:$0xf] %v590
    %623 = vst [vmem:[%s5 + $0x4] sm:$0xf] %v591
    %624 = vst [vmem:[%s5 + $0x8] sm:$0xf] %v592
    %625 = vst [vmem:[%s5 + $0xc] sm:$0xf] %v593
    %626 = vst [vmem:[%s5 + $0x10] sm:$0xf] %v594
    %627 = vst [vmem:[%s5 + $0x14] sm:$0xf] %v595
    %628 = vst [vmem:[%s5 + $0x18] sm:$0xf] %v596
    %629 = vst [vmem:[%s5 + $0x1c] sm:$0xf] %v597
    %630 = vst [vmem:[%s5 + $0x20] sm:$0xf] %v598
    %631 = vst [vmem:[%s5 + $0x24] sm:$0xf] %v599
    %632 = vst [vmem:[%s5 + $0x28] sm:$0xf] %v600
    %633 = vst [vmem:[%s5 + $0x2c] sm:$0xf] %v601
    %634 = vst [vmem:[%s5 + $0x30] sm:$0xf] %v602
    %635 = vst [vmem:[%s5 + $0x34] sm:$0xf] %v603
    %636 = vst [vmem:[%s5 + $0x38] sm:$0xf] %v604
    %637 = vst [vmem:[%s5 + $0x3c] sm:$0xf] %v605
  $region29: #{_lambda_.7} parent=0 // pred_fallthru
    _
  // Predicated region
  $region30: #{_lambda_.7} parent=0 // pred_check
    _
  $region31: #{_lambda_.7} parent=0 // pred_check_branch
    %639 = sbr.rel (0) target = $region33
  $region32: #{_lambda_.7} parent=0 // pred_region
    _
  $region33: #{_lambda_.7} parent=0 // pred_fallthru
    _
  // Predicated region
  $region34: #{_lambda_.7} parent=0 // pred_check
    _
  $region35: #{_lambda_.7} parent=0 // pred_check_branch
    %641 = sbr.rel (0) target = $region37
  $region36: #{_lambda_.7} parent=0 // pred_region
    _
  $region37: #{_lambda_.7} parent=0 // pred_fallthru
    _

</llo_original>
